<compile_context>
chip_gen: v6e
topology: v6e:2x2x1
jax: 0.10.0
libtpu: 0.0.40
codegen_flags: <defaults>
</compile_context>

<pallas_src>
import functools
import math

import jax
import jax.numpy as jnp
from jax import lax
from jax.experimental import pallas as pl
from jax.experimental.pallas import tpu as pltpu


# ------------------------------- kernel body --------------------------------

def _softmax_lastdim(logits):
    m = jnp.max(logits, axis=-1, keepdims=True)
    e = jnp.exp(logits - m)
    return e * pl.reciprocal(jnp.sum(e, axis=-1, keepdims=True), approx=True)


def _resi_cross_stitch_kernel(x1_ref, x2_ref,
                              wp_ref, bp_ref,       # (2,E,E) bf16 , (2,E)  f32
                              wi_ref, bi_ref,       # (2,E,BN) bf16, (2,BN) f32
                              wo_ref, bo_ref,       # (2,BN,E) bf16, (2,E)  f32
                              out1_ref, out2_ref, s12_ref, s21_ref,
                              *, scale):
    x1 = x1_ref[...]                          # (S1, E) f32
    x2 = x2_ref[...]                          # (S2, E) f32
    x1b = x1.astype(jnp.bfloat16)
    x2b = x2.astype(jnp.bfloat16)

    # Projections: proj21(input1), proj12(input2). bf16 MXU, f32 accumulate/bias.
    p1 = jnp.dot(x1b, wp_ref[0], preferred_element_type=jnp.float32) + bp_ref[0:1]
    p2 = jnp.dot(x2b, wp_ref[1], preferred_element_type=jnp.float32) + bp_ref[1:2]

    # scores12[i, j] = softmax_j( <input1_i, proj12(input2)_j> / sqrt(E) )
    l12 = lax.dot_general(x1b, p2.astype(jnp.bfloat16),
                          (((1,), (1,)), ((), ())),
                          preferred_element_type=jnp.float32) * scale
    s12 = _softmax_lastdim(l12)               # (S1, S2)

    # scores21[j, i] = softmax_i( <proj21(input1)_i, input2_j> / sqrt(E) )
    l21 = lax.dot_general(x2b, p1.astype(jnp.bfloat16),
                          (((1,), (1,)), ((), ())),
                          preferred_element_type=jnp.float32) * scale
    s21 = _softmax_lastdim(l21)               # (S2, S1)

    s12_ref[...] = s12
    s21_ref[...] = s21

    # Attention-weighted contexts.
    a12 = jnp.dot(s12.astype(jnp.bfloat16), x2b,
                  preferred_element_type=jnp.float32)     # (S1, E)
    a21 = jnp.dot(s21.astype(jnp.bfloat16), x1b,
                  preferred_element_type=jnp.float32)     # (S2, E)

    # Adapters: Linear -> ReLU -> Linear (weights read at use-site).
    h12 = jnp.maximum(
        jnp.dot(a12.astype(jnp.bfloat16), wi_ref[0],
                preferred_element_type=jnp.float32) + bi_ref[0:1], 0.0)
    in12 = jnp.dot(h12.astype(jnp.bfloat16), wo_ref[0],
                   preferred_element_type=jnp.float32) + bo_ref[0:1]

    h21 = jnp.maximum(
        jnp.dot(a21.astype(jnp.bfloat16), wi_ref[1],
                preferred_element_type=jnp.float32) + bi_ref[1:2], 0.0)
    in21 = jnp.dot(h21.astype(jnp.bfloat16), wo_ref[1],
                   preferred_element_type=jnp.float32) + bo_ref[1:2]

    # Residual sigmoid gating (f32 VPU/EUP), single full-tile stores.
    out1_ref[...] = x1 * jax.nn.sigmoid(in12) + in12
    out2_ref[...] = x2 * jax.nn.sigmoid(in21) + 0.0001 * in21


# ------------------------------ wrapper (glue) -------------------------------

def resi_cross_stitch_forward(layer_key, input1, input2, params):
    B, S1, D1 = input1.shape
    Bx, S2, D2 = input2.shape
    assert B == Bx, "batch size mismatch"
    # Fail loudly on shapes the kernel does not support (see TODO above).
    assert D1 == D2, "kernel implements the input1_dim == input2_dim path only"
    E = D1

    ad12 = params["adapters12"][layer_key]
    ad21 = params["adapters21"][layer_key]
    BN = ad12["Wi"].shape[1]

    # Pack the 12 small parameters into 6 slabs; matmul weights as bf16.
    wp = jnp.stack([params["W21"], params["W12"]]).astype(jnp.bfloat16)   # (2,E,E)
    bp = jnp.stack([params["b21"], params["b12"]])                        # (2,E)
    wi = jnp.stack([ad12["Wi"], ad21["Wi"]]).astype(jnp.bfloat16)         # (2,E,BN)
    bi = jnp.stack([ad12["bi"], ad21["bi"]])                              # (2,BN)
    wo = jnp.stack([ad12["Wo"], ad21["Wo"]]).astype(jnp.bfloat16)         # (2,BN,E)
    bo = jnp.stack([ad12["bo"], ad21["bo"]])                              # (2,E)

    # Advisory cost estimate for the XLA scheduler.
    flops = B * (2 * E * E * (S1 + S2)      # projections
                 + 8 * E * S1 * S2          # score matmuls + context bmms
                 + 4 * E * BN * (S1 + S2))  # adapters
    trans = B * (2 * S1 * S2 + E * (S1 + S2) + (S1 + S2))
    bytes_accessed = (4 * 2 * B * E * (S1 + S2)          # x in + out (f32)
                      + 4 * 2 * B * S1 * S2              # scores out (f32)
                      + 2 * (2 * E * E + 4 * E * BN)     # bf16 weights
                      + 4 * (4 * E + 2 * BN))            # f32 biases

    kernel = functools.partial(_resi_cross_stitch_kernel, scale=1.0 / math.sqrt(E))

    def zero2(b):
        return (0, 0)

    def zero3(b):
        return (0, 0, 0)

    out1, out2, s12, s21 = pl.pallas_call(
        kernel,
        grid=(B,),
        in_specs=[
            pl.BlockSpec((None, S1, E), lambda b: (b, 0, 0)),
            pl.BlockSpec((None, S2, E), lambda b: (b, 0, 0)),
            pl.BlockSpec(wp.shape, zero3),
            pl.BlockSpec(bp.shape, zero2),
            pl.BlockSpec(wi.shape, zero3),
            pl.BlockSpec(bi.shape, zero2),
            pl.BlockSpec(wo.shape, zero3),
            pl.BlockSpec(bo.shape, zero2),
        ],
        out_specs=(
            pl.BlockSpec((None, S1, E), lambda b: (b, 0, 0)),
            pl.BlockSpec((None, S2, E), lambda b: (b, 0, 0)),
            pl.BlockSpec((None, S1, S2), lambda b: (b, 0, 0)),
            pl.BlockSpec((None, S2, S1), lambda b: (b, 0, 0)),
        ),
        out_shape=(
            jax.ShapeDtypeStruct((B, S1, E), jnp.float32),
            jax.ShapeDtypeStruct((B, S2, E), jnp.float32),
            jax.ShapeDtypeStruct((B, S1, S2), jnp.float32),
            jax.ShapeDtypeStruct((B, S2, S1), jnp.float32),
        ),
        compiler_params=pltpu.CompilerParams(dimension_semantics=("parallel",)),
        cost_estimate=pl.CostEstimate(flops=flops, transcendentals=trans,
                                      bytes_accessed=bytes_accessed),
    )(input1, input2, wp, bp, wi, bi, wo, bo)
    return out1, out2, s12, s21


# ----------------------- deterministic parameter init ------------------------

def init_resi_cross_stitch_params(key, E, BN, n_layers):
    keys = iter(jax.random.split(key, 4 + 8 * n_layers))

    def w(shape, scale=0.05):
        return scale * jax.random.normal(next(keys), shape, jnp.float32)

    params = {
        # proj21: Linear(D1 -> D2); proj12: Linear(D2 -> D1); stored (in, out).
        "W21": w((E, E)), "b21": w((E,)),
        "W12": w((E, E)), "b12": w((E,)),
        "adapters12": [],
        "adapters21": [],
    }
    for _ in range(n_layers):
        params["adapters12"].append(
            {"Wi": w((E, BN)), "bi": w((BN,)), "Wo": w((BN, E)), "bo": w((E,))})
        params["adapters21"].append(
            {"Wi": w((E, BN)), "bi": w((BN,)), "Wo": w((BN, E)), "bo": w((E,))})
    return params


# ------------------------------ pure-JAX reference ---------------------------

def reference_forward(layer_key, input1, input2, p):
    scale = 1.0 / jnp.sqrt(jnp.float32(input1.shape[-1]))
    input1_proj = input1 @ p["W21"] + p["b21"]
    input2_proj = input2 @ p["W12"] + p["b12"]
    ps1 = jnp.einsum("bid,bjd->bij", input1, input2_proj) * scale
    ps2 = jnp.einsum("bid,bjd->bij", input1_proj, input2) * scale
    scores12 = jax.nn.softmax(ps1, axis=2)
    scores21 = jax.nn.softmax(jnp.swapaxes(ps2, 1, 2), axis=2)

    def adapter(x, a):
        return jnp.maximum(x @ a["Wi"] + a["bi"], 0.0) @ a["Wo"] + a["bo"]

    in12 = adapter(jnp.einsum("bij,bjd->bid", scores12, input2),
                   p["adapters12"][layer_key])
    in21 = adapter(jnp.einsum("bij,bjd->bid", scores21, input1),
                   p["adapters21"][layer_key])
    out1 = input1 * jax.nn.sigmoid(in12) + in12
    out2 = input2 * jax.nn.sigmoid(in21) + 0.0001 * in21
    return out1, out2, scores12, scores21


# ------------------------------------ main -----------------------------------

if __name__ == "__main__":
    B, S1, S2 = 2, 8, 16
    E = 32            # input1_dim == input2_dim
    BN = 64           # adapter_bottleneck_dim (module default 256; small here)
    n_layers = 2
    layer_key = 0

    key = jax.random.PRNGKey(0)
    k1, k2, kp = jax.random.split(key, 3)
    input1 = jax.random.normal(k1, (B, S1, E), jnp.float32)
    input2 = jax.random.normal(k2, (B, S2, E), jnp.float32)
    params = init_resi_cross_stitch_params(kp, E, BN, n_layers)

    outs = resi_cross_stitch_forward(layer_key, input1, input2, params)
    outs = jax.block_until_ready(outs)
    refs = reference_forward(layer_key, input1, input2, params)

    names = ["output1", "output2", "scores12", "scores21"]
    expected_shapes = [(B, S1, E), (B, S2, E), (B, S1, S2), (B, S2, S1)]
    for name, shp, o, r in zip(names, expected_shapes, outs, refs):
        assert o.shape == shp, f"{name} shape {o.shape} != {shp}"
        err = float(jnp.max(jnp.abs(o - r)))
        assert jnp.allclose(o, r, atol=2e-2, rtol=2e-2), \
            f"{name} mismatch, max err {err}"

    print("KERNEL_OK")
</pallas_src>

<mosaic_0001>
module attributes {stable_mosaic.version = 11 : i64} {
  func.func @_resi_cross_stitch_kernel(%arg0: i32, %arg1: memref<1x8x32xf32, #tpu.memory_space<vmem>>, %arg2: memref<1x16x32xf32, #tpu.memory_space<vmem>>, %arg3: memref<2x32x32xbf16, #tpu.memory_space<vmem>>, %arg4: memref<2x32xf32, #tpu.memory_space<vmem>>, %arg5: memref<2x32x64xbf16, #tpu.memory_space<vmem>>, %arg6: memref<2x64xf32, #tpu.memory_space<vmem>>, %arg7: memref<2x64x32xbf16, #tpu.memory_space<vmem>>, %arg8: memref<2x32xf32, #tpu.memory_space<vmem>>, %arg9: memref<1x8x32xf32, #tpu.memory_space<vmem>>, %arg10: memref<1x16x32xf32, #tpu.memory_space<vmem>>, %arg11: memref<1x8x16xf32, #tpu.memory_space<vmem>>, %arg12: memref<1x16x8xf32, #tpu.memory_space<vmem>>) attributes {dimension_semantics = [#tpu.dimension_semantics<parallel>], iteration_bounds = array<i64: 2>, scalar_prefetch = 0 : i64, scratch_operands = 0 : i64, tpu.core_type = #tpu.core_type<tc>, window_params = [{transform_indices = @transform_0, window_bounds = array<i64: 1, 8, 32>}, {transform_indices = @transform_1, window_bounds = array<i64: 1, 16, 32>}, {pipeline_mode = #tpu.pipeline_mode<synchronous>, transform_indices = @transform_2, window_bounds = array<i64: 2, 32, 32>}, {pipeline_mode = #tpu.pipeline_mode<synchronous>, transform_indices = @transform_3, window_bounds = array<i64: 2, 32>}, {pipeline_mode = #tpu.pipeline_mode<synchronous>, transform_indices = @transform_4, window_bounds = array<i64: 2, 32, 64>}, {pipeline_mode = #tpu.pipeline_mode<synchronous>, transform_indices = @transform_5, window_bounds = array<i64: 2, 64>}, {pipeline_mode = #tpu.pipeline_mode<synchronous>, transform_indices = @transform_6, window_bounds = array<i64: 2, 64, 32>}, {pipeline_mode = #tpu.pipeline_mode<synchronous>, transform_indices = @transform_7, window_bounds = array<i64: 2, 32>}, {transform_indices = @transform_8, window_bounds = array<i64: 1, 8, 32>}, {transform_indices = @transform_9, window_bounds = array<i64: 1, 16, 32>}, {transform_indices = @transform_10, window_bounds = array<i64: 1, 8, 16>}, {transform_indices = @transform_11, window_bounds = array<i64: 1, 16, 8>}]} {
    %c0 = arith.constant 0 : index
    %c0_0 = arith.constant 0 : index
    %c0_1 = arith.constant 0 : index
    %0 = vector.load %arg1[%c0, %c0_0, %c0_1] : memref<1x8x32xf32, #tpu.memory_space<vmem>>, vector<1x8x32xf32>
    %1 = vector.shape_cast %0 : vector<1x8x32xf32> to vector<8x32xf32>
    %c0_2 = arith.constant 0 : index
    %c0_3 = arith.constant 0 : index
    %c0_4 = arith.constant 0 : index
    %2 = vector.load %arg2[%c0_2, %c0_3, %c0_4] : memref<1x16x32xf32, #tpu.memory_space<vmem>>, vector<1x16x32xf32>
    %3 = vector.shape_cast %2 : vector<1x16x32xf32> to vector<16x32xf32>
    %4 = arith.truncf %1 : vector<8x32xf32> to vector<8x32xbf16>
    %5 = arith.truncf %3 : vector<16x32xf32> to vector<16x32xbf16>
    %c0_5 = arith.constant 0 : index
    %c0_6 = arith.constant 0 : index
    %c0_7 = arith.constant 0 : index
    %6 = vector.load %arg3[%c0_5, %c0_6, %c0_7] : memref<2x32x32xbf16, #tpu.memory_space<vmem>>, vector<1x32x32xbf16>
    %7 = vector.shape_cast %6 : vector<1x32x32xbf16> to vector<32x32xbf16>
    %cst = arith.constant dense<0.000000e+00> : vector<8x32xf32>
    %8 = tpu.matmul %4, %7, %cst {dimension_numbers = #tpu.dot_dimension_numbers<[1], [0], [0], [1], [0, 0, 1, 1], [], []>} : vector<8x32xbf16>, vector<32x32xbf16>, vector<8x32xf32> -> vector<8x32xf32>
    %c0_8 = arith.constant 0 : index
    %c0_9 = arith.constant 0 : index
    %9 = vector.load %arg4[%c0_8, %c0_9] : memref<2x32xf32, #tpu.memory_space<vmem>>, vector<1x32xf32>
    %10 = vector.broadcast %9 : vector<1x32xf32> to vector<8x32xf32>
    %11 = arith.addf %8, %10 : vector<8x32xf32>
    %c1 = arith.constant 1 : index
    %c0_10 = arith.constant 0 : index
    %c0_11 = arith.constant 0 : index
    %12 = vector.load %arg3[%c1, %c0_10, %c0_11] : memref<2x32x32xbf16, #tpu.memory_space<vmem>>, vector<1x32x32xbf16>
    %13 = vector.shape_cast %12 : vector<1x32x32xbf16> to vector<32x32xbf16>
    %cst_12 = arith.constant dense<0.000000e+00> : vector<16x32xf32>
    %14 = tpu.matmul %5, %13, %cst_12 {dimension_numbers = #tpu.dot_dimension_numbers<[1], [0], [0], [1], [0, 0, 1, 1], [], []>} : vector<16x32xbf16>, vector<32x32xbf16>, vector<16x32xf32> -> vector<16x32xf32>
    %c1_13 = arith.constant 1 : index
    %c0_14 = arith.constant 0 : index
    %15 = vector.load %arg4[%c1_13, %c0_14] : memref<2x32xf32, #tpu.memory_space<vmem>>, vector<1x32xf32>
    %16 = vector.broadcast %15 : vector<1x32xf32> to vector<16x32xf32>
    %17 = arith.addf %14, %16 : vector<16x32xf32>
    %18 = arith.truncf %17 : vector<16x32xf32> to vector<16x32xbf16>
    %cst_15 = arith.constant dense<0.000000e+00> : vector<8x16xf32>
    %19 = tpu.matmul %4, %18, %cst_15 {dimension_numbers = #tpu.dot_dimension_numbers<[1], [1], [0], [0], [0, 0, 1, 0], [], []>} : vector<8x32xbf16>, vector<16x32xbf16>, vector<8x16xf32> -> vector<8x16xf32>
    %cst_16 = arith.constant 0.176776692 : f32
    %20 = vector.broadcast %cst_16 : f32 to vector<8x16xf32>
    %21 = arith.mulf %19, %20 : vector<8x16xf32>
    %cst_17 = arith.constant dense<0xFF800000> : vector<8xf32>
    %22 = vector.multi_reduction <maximumf>, %21, %cst_17 [1] : vector<8x16xf32> to vector<8xf32>
    %23 = vector.shape_cast %22 : vector<8xf32> to vector<8x1xf32>
    %24 = vector.broadcast %23 : vector<8x1xf32> to vector<8x16xf32>
    %25 = arith.subf %21, %24 : vector<8x16xf32>
    %26 = math.exp %25 : vector<8x16xf32>
    %cst_18 = arith.constant dense<0.000000e+00> : vector<8xf32>
    %27 = vector.multi_reduction <add>, %26, %cst_18 [1] : vector<8x16xf32> to vector<8xf32>
    %28 = vector.shape_cast %27 : vector<8xf32> to vector<8x1xf32>
    %29 = tpu.reciprocal %28 {approx = true} : vector<8x1xf32> -> vector<8x1xf32>
    %30 = vector.broadcast %29 : vector<8x1xf32> to vector<8x16xf32>
    %31 = arith.mulf %26, %30 : vector<8x16xf32>
    %32 = arith.truncf %11 : vector<8x32xf32> to vector<8x32xbf16>
    %cst_19 = arith.constant dense<0.000000e+00> : vector<16x8xf32>
    %33 = tpu.matmul %5, %32, %cst_19 {dimension_numbers = #tpu.dot_dimension_numbers<[1], [1], [0], [0], [0, 0, 1, 0], [], []>} : vector<16x32xbf16>, vector<8x32xbf16>, vector<16x8xf32> -> vector<16x8xf32>
    %cst_20 = arith.constant 0.176776692 : f32
    %34 = vector.broadcast %cst_20 : f32 to vector<16x8xf32>
    %35 = arith.mulf %33, %34 : vector<16x8xf32>
    %cst_21 = arith.constant dense<0xFF800000> : vector<16xf32>
    %36 = vector.multi_reduction <maximumf>, %35, %cst_21 [1] : vector<16x8xf32> to vector<16xf32>
    %37 = vector.shape_cast %36 : vector<16xf32> to vector<16x1xf32>
    %38 = vector.broadcast %37 : vector<16x1xf32> to vector<16x8xf32>
    %39 = arith.subf %35, %38 : vector<16x8xf32>
    %40 = math.exp %39 : vector<16x8xf32>
    %cst_22 = arith.constant dense<0.000000e+00> : vector<16xf32>
    %41 = vector.multi_reduction <add>, %40, %cst_22 [1] : vector<16x8xf32> to vector<16xf32>
    %42 = vector.shape_cast %41 : vector<16xf32> to vector<16x1xf32>
    %43 = tpu.reciprocal %42 {approx = true} : vector<16x1xf32> -> vector<16x1xf32>
    %44 = vector.broadcast %43 : vector<16x1xf32> to vector<16x8xf32>
    %45 = arith.mulf %40, %44 : vector<16x8xf32>
    %c0_23 = arith.constant 0 : index
    %c0_24 = arith.constant 0 : index
    %c0_25 = arith.constant 0 : index
    %46 = vector.load %arg11[%c0_23, %c0_24, %c0_25] : memref<1x8x16xf32, #tpu.memory_space<vmem>>, vector<1x8x16xf32>
    %47 = vector.shape_cast %46 : vector<1x8x16xf32> to vector<8x16xf32>
    %48 = vector.shape_cast %31 : vector<8x16xf32> to vector<1x8x16xf32>
    tpu.vector_store %arg11[%c0_23, %c0_24, %c0_25], %48 {strides = array<i32>} : memref<1x8x16xf32, #tpu.memory_space<vmem>>, vector<1x8x16xf32>,
    %c0_26 = arith.constant 0 : index
    %c0_27 = arith.constant 0 : index
    %c0_28 = arith.constant 0 : index
    %49 = vector.load %arg12[%c0_26, %c0_27, %c0_28] : memref<1x16x8xf32, #tpu.memory_space<vmem>>, vector<1x16x8xf32>
    %50 = vector.shape_cast %49 : vector<1x16x8xf32> to vector<16x8xf32>
    %51 = vector.shape_cast %45 : vector<16x8xf32> to vector<1x16x8xf32>
    tpu.vector_store %arg12[%c0_26, %c0_27, %c0_28], %51 {strides = array<i32>} : memref<1x16x8xf32, #tpu.memory_space<vmem>>, vector<1x16x8xf32>,
    %52 = arith.truncf %31 : vector<8x16xf32> to vector<8x16xbf16>
    %cst_29 = arith.constant dense<0.000000e+00> : vector<8x32xf32>
    %53 = tpu.matmul %52, %5, %cst_29 {dimension_numbers = #tpu.dot_dimension_numbers<[1], [0], [0], [1], [0, 0, 1, 1], [], []>} : vector<8x16xbf16>, vector<16x32xbf16>, vector<8x32xf32> -> vector<8x32xf32>
    %54 = arith.truncf %45 : vector<16x8xf32> to vector<16x8xbf16>
    %cst_30 = arith.constant dense<0.000000e+00> : vector<16x32xf32>
    %55 = tpu.matmul %54, %4, %cst_30 {dimension_numbers = #tpu.dot_dimension_numbers<[1], [0], [0], [1], [0, 0, 1, 1], [], []>} : vector<16x8xbf16>, vector<8x32xbf16>, vector<16x32xf32> -> vector<16x32xf32>
    %56 = arith.truncf %53 : vector<8x32xf32> to vector<8x32xbf16>
    %c0_31 = arith.constant 0 : index
    %c0_32 = arith.constant 0 : index
    %c0_33 = arith.constant 0 : index
    %57 = vector.load %arg5[%c0_31, %c0_32, %c0_33] : memref<2x32x64xbf16, #tpu.memory_space<vmem>>, vector<1x32x64xbf16>
    %58 = vector.shape_cast %57 : vector<1x32x64xbf16> to vector<32x64xbf16>
    %cst_34 = arith.constant dense<0.000000e+00> : vector<8x64xf32>
    %59 = tpu.matmul %56, %58, %cst_34 {dimension_numbers = #tpu.dot_dimension_numbers<[1], [0], [0], [1], [0, 0, 1, 1], [], []>} : vector<8x32xbf16>, vector<32x64xbf16>, vector<8x64xf32> -> vector<8x64xf32>
    %c0_35 = arith.constant 0 : index
    %c0_36 = arith.constant 0 : index
    %60 = vector.load %arg6[%c0_35, %c0_36] : memref<2x64xf32, #tpu.memory_space<vmem>>, vector<1x64xf32>
    %61 = vector.broadcast %60 : vector<1x64xf32> to vector<8x64xf32>
    %62 = arith.addf %59, %61 : vector<8x64xf32>
    %cst_37 = arith.constant 0.000000e+00 : f32
    %63 = vector.broadcast %cst_37 : f32 to vector<8x64xf32>
    %64 = arith.maximumf %62, %63 : vector<8x64xf32>
    %65 = arith.truncf %64 : vector<8x64xf32> to vector<8x64xbf16>
    %c0_38 = arith.constant 0 : index
    %c0_39 = arith.constant 0 : index
    %c0_40 = arith.constant 0 : index
    %66 = vector.load %arg7[%c0_38, %c0_39, %c0_40] : memref<2x64x32xbf16, #tpu.memory_space<vmem>>, vector<1x64x32xbf16>
    %67 = vector.shape_cast %66 : vector<1x64x32xbf16> to vector<64x32xbf16>
    %cst_41 = arith.constant dense<0.000000e+00> : vector<8x32xf32>
    %68 = tpu.matmul %65, %67, %cst_41 {dimension_numbers = #tpu.dot_dimension_numbers<[1], [0], [0], [1], [0, 0, 1, 1], [], []>} : vector<8x64xbf16>, vector<64x32xbf16>, vector<8x32xf32> -> vector<8x32xf32>
    %c0_42 = arith.constant 0 : index
    %c0_43 = arith.constant 0 : index
    %69 = vector.load %arg8[%c0_42, %c0_43] : memref<2x32xf32, #tpu.memory_space<vmem>>, vector<1x32xf32>
    %70 = vector.broadcast %69 : vector<1x32xf32> to vector<8x32xf32>
    %71 = arith.addf %68, %70 : vector<8x32xf32>
    %72 = arith.truncf %55 : vector<16x32xf32> to vector<16x32xbf16>
    %c1_44 = arith.constant 1 : index
    %c0_45 = arith.constant 0 : index
    %c0_46 = arith.constant 0 : index
    %73 = vector.load %arg5[%c1_44, %c0_45, %c0_46] : memref<2x32x64xbf16, #tpu.memory_space<vmem>>, vector<1x32x64xbf16>
    %74 = vector.shape_cast %73 : vector<1x32x64xbf16> to vector<32x64xbf16>
    %cst_47 = arith.constant dense<0.000000e+00> : vector<16x64xf32>
    %75 = tpu.matmul %72, %74, %cst_47 {dimension_numbers = #tpu.dot_dimension_numbers<[1], [0], [0], [1], [0, 0, 1, 1], [], []>} : vector<16x32xbf16>, vector<32x64xbf16>, vector<16x64xf32> -> vector<16x64xf32>
    %c1_48 = arith.constant 1 : index
    %c0_49 = arith.constant 0 : index
    %76 = vector.load %arg6[%c1_48, %c0_49] : memref<2x64xf32, #tpu.memory_space<vmem>>, vector<1x64xf32>
    %77 = vector.broadcast %76 : vector<1x64xf32> to vector<16x64xf32>
    %78 = arith.addf %75, %77 : vector<16x64xf32>
    %cst_50 = arith.constant 0.000000e+00 : f32
    %79 = vector.broadcast %cst_50 : f32 to vector<16x64xf32>
    %80 = arith.maximumf %78, %79 : vector<16x64xf32>
    %81 = arith.truncf %80 : vector<16x64xf32> to vector<16x64xbf16>
    %c1_51 = arith.constant 1 : index
    %c0_52 = arith.constant 0 : index
    %c0_53 = arith.constant 0 : index
    %82 = vector.load %arg7[%c1_51, %c0_52, %c0_53] : memref<2x64x32xbf16, #tpu.memory_space<vmem>>, vector<1x64x32xbf16>
    %83 = vector.shape_cast %82 : vector<1x64x32xbf16> to vector<64x32xbf16>
    %cst_54 = arith.constant dense<0.000000e+00> : vector<16x32xf32>
    %84 = tpu.matmul %81, %83, %cst_54 {dimension_numbers = #tpu.dot_dimension_numbers<[1], [0], [0], [1], [0, 0, 1, 1], [], []>} : vector<16x64xbf16>, vector<64x32xbf16>, vector<16x32xf32> -> vector<16x32xf32>
    %c1_55 = arith.constant 1 : index
    %c0_56 = arith.constant 0 : index
    %85 = vector.load %arg8[%c1_55, %c0_56] : memref<2x32xf32, #tpu.memory_space<vmem>>, vector<1x32xf32>
    %86 = vector.broadcast %85 : vector<1x32xf32> to vector<16x32xf32>
    %87 = arith.addf %84, %86 : vector<16x32xf32>
    %88 = arith.negf %71 : vector<8x32xf32>
    %89 = math.exp %88 : vector<8x32xf32>
    %cst_57 = arith.constant 1.000000e+00 : f32
    %90 = vector.broadcast %cst_57 : f32 to vector<8x32xf32>
    %91 = arith.addf %90, %89 : vector<8x32xf32>
    %92 = arith.divf %90, %91 : vector<8x32xf32>
    %93 = arith.mulf %1, %92 : vector<8x32xf32>
    %94 = arith.addf %93, %71 : vector<8x32xf32>
    %c0_58 = arith.constant 0 : index
    %c0_59 = arith.constant 0 : index
    %c0_60 = arith.constant 0 : index
    %95 = vector.load %arg9[%c0_58, %c0_59, %c0_60] : memref<1x8x32xf32, #tpu.memory_space<vmem>>, vector<1x8x32xf32>
    %96 = vector.shape_cast %95 : vector<1x8x32xf32> to vector<8x32xf32>
    %97 = vector.shape_cast %94 : vector<8x32xf32> to vector<1x8x32xf32>
    tpu.vector_store %arg9[%c0_58, %c0_59, %c0_60], %97 {strides = array<i32>} : memref<1x8x32xf32, #tpu.memory_space<vmem>>, vector<1x8x32xf32>,
    %98 = arith.negf %87 : vector<16x32xf32>
    %99 = math.exp %98 : vector<16x32xf32>
    %cst_61 = arith.constant 1.000000e+00 : f32
    %100 = vector.broadcast %cst_61 : f32 to vector<16x32xf32>
    %101 = arith.addf %100, %99 : vector<16x32xf32>
    %102 = arith.divf %100, %101 : vector<16x32xf32>
    %103 = arith.mulf %3, %102 : vector<16x32xf32>
    %cst_62 = arith.constant 9.99999974E-5 : f32
    %104 = vector.broadcast %cst_62 : f32 to vector<16x32xf32>
    %105 = arith.mulf %104, %87 : vector<16x32xf32>
    %106 = arith.addf %103, %105 : vector<16x32xf32>
    %c0_63 = arith.constant 0 : index
    %c0_64 = arith.constant 0 : index
    %c0_65 = arith.constant 0 : index
    %107 = vector.load %arg10[%c0_63, %c0_64, %c0_65] : memref<1x16x32xf32, #tpu.memory_space<vmem>>, vector<1x16x32xf32>
    %108 = vector.shape_cast %107 : vector<1x16x32xf32> to vector<16x32xf32>
    %109 = vector.shape_cast %106 : vector<16x32xf32> to vector<1x16x32xf32>
    tpu.vector_store %arg10[%c0_63, %c0_64, %c0_65], %109 {strides = array<i32>} : memref<1x16x32xf32, #tpu.memory_space<vmem>>, vector<1x16x32xf32>,
    return
  }
  func.func @transform_0(%arg0: i32) -> (i32, i32, i32) {
    %c0_i32 = arith.constant 0 : i32
    %c0_i32_0 = arith.constant 0 : i32
    %c0_i32_1 = arith.constant 0 : i32
    return %arg0, %c0_i32, %c0_i32_0 : i32, i32, i32
  }
  func.func @transform_1(%arg0: i32) -> (i32, i32, i32) {
    %c0_i32 = arith.constant 0 : i32
    %c0_i32_0 = arith.constant 0 : i32
    %c0_i32_1 = arith.constant 0 : i32
    return %arg0, %c0_i32, %c0_i32_0 : i32, i32, i32
  }
  func.func @transform_2(%arg0: i32) -> (i32, i32, i32) {
    %c0_i32 = arith.constant 0 : i32
    %c0_i32_0 = arith.constant 0 : i32
    %c0_i32_1 = arith.constant 0 : i32
    %c0_i32_2 = arith.constant 0 : i32
    return %c0_i32, %c0_i32_0, %c0_i32_1 : i32, i32, i32
  }
  func.func @transform_3(%arg0: i32) -> (i32, i32) {
    %c0_i32 = arith.constant 0 : i32
    %c0_i32_0 = arith.constant 0 : i32
    %c0_i32_1 = arith.constant 0 : i32
    return %c0_i32, %c0_i32_0 : i32, i32
  }
  func.func @transform_4(%arg0: i32) -> (i32, i32, i32) {
    %c0_i32 = arith.constant 0 : i32
    %c0_i32_0 = arith.constant 0 : i32
    %c0_i32_1 = arith.constant 0 : i32
    %c0_i32_2 = arith.constant 0 : i32
    return %c0_i32, %c0_i32_0, %c0_i32_1 : i32, i32, i32
  }
  func.func @transform_5(%arg0: i32) -> (i32, i32) {
    %c0_i32 = arith.constant 0 : i32
    %c0_i32_0 = arith.constant 0 : i32
    %c0_i32_1 = arith.constant 0 : i32
    return %c0_i32, %c0_i32_0 : i32, i32
  }
  func.func @transform_6(%arg0: i32) -> (i32, i32, i32) {
    %c0_i32 = arith.constant 0 : i32
    %c0_i32_0 = arith.constant 0 : i32
    %c0_i32_1 = arith.constant 0 : i32
    %c0_i32_2 = arith.constant 0 : i32
    return %c0_i32, %c0_i32_0, %c0_i32_1 : i32, i32, i32
  }
  func.func @transform_7(%arg0: i32) -> (i32, i32) {
    %c0_i32 = arith.constant 0 : i32
    %c0_i32_0 = arith.constant 0 : i32
    %c0_i32_1 = arith.constant 0 : i32
    return %c0_i32, %c0_i32_0 : i32, i32
  }
  func.func @transform_8(%arg0: i32) -> (i32, i32, i32) {
    %c0_i32 = arith.constant 0 : i32
    %c0_i32_0 = arith.constant 0 : i32
    %c0_i32_1 = arith.constant 0 : i32
    return %arg0, %c0_i32, %c0_i32_0 : i32, i32, i32
  }
  func.func @transform_9(%arg0: i32) -> (i32, i32, i32) {
    %c0_i32 = arith.constant 0 : i32
    %c0_i32_0 = arith.constant 0 : i32
    %c0_i32_1 = arith.constant 0 : i32
    return %arg0, %c0_i32, %c0_i32_0 : i32, i32, i32
  }
  func.func @transform_10(%arg0: i32) -> (i32, i32, i32) {
    %c0_i32 = arith.constant 0 : i32
    %c0_i32_0 = arith.constant 0 : i32
    %c0_i32_1 = arith.constant 0 : i32
    return %arg0, %c0_i32, %c0_i32_0 : i32, i32, i32
  }
  func.func @transform_11(%arg0: i32) -> (i32, i32, i32) {
    %c0_i32 = arith.constant 0 : i32
    %c0_i32_0 = arith.constant 0 : i32
    %c0_i32_1 = arith.constant 0 : i32
    return %arg0, %c0_i32, %c0_i32_0 : i32, i32, i32
  }
}

</mosaic_0001>

<llo_original>
// kernel: tpu_custom_call.1
$region0: #{tpu_custom_call.1}
  #allocation0 [shape = 'u32[]', space=smem, size = 0x4, offset = 0x4, fixed_abs, tag = 'smem constant byte address 0x4 - core index']
  #allocation1 [shape = 'u32[144,128]{1,0:T(1,128)}', space=vmem, size = 0x12000, scoped, tag = 'internal scratch']
  %s0 = inlined_call_operand.hbm [shape: f32[2,8,32], index: 0, kind: input, shape index: {}]
  %s1 = inlined_call_operand.vmem [shape: f32[2,16,32], index: 1, kind: input, shape index: {}]
  %s2 = inlined_call_operand.vmem [shape: bf16[2,32,32], index: 2, kind: input, shape index: {}]
  %s3 = inlined_call_operand.vmem [shape: f32[2,32], index: 3, kind: input, shape index: {}]
  %s4 = inlined_call_operand.vmem [shape: bf16[2,32,64], index: 4, kind: input, shape index: {}]
  %s5 = inlined_call_operand.vmem [shape: f32[2,64], index: 5, kind: input, shape index: {}]
  %s6 = inlined_call_operand.vmem [shape: bf16[2,64,32], index: 6, kind: input, shape index: {}]
  %s7 = inlined_call_operand.vmem [shape: f32[2,32], index: 7, kind: input, shape index: {}]
  %s8 = inlined_call_operand.hbm [shape: f32[2,8,32], index: 8, kind: output, shape index: {0}]
  %s9 = inlined_call_operand.hbm [shape: f32[2,16,32], index: 9, kind: output, shape index: {1}]
  %s10 = inlined_call_operand.hbm [shape: f32[2,8,16], index: 10, kind: output, shape index: {2}]
  %s11 = inlined_call_operand.vmem [shape: f32[2,16,8], index: 11, kind: output, shape index: {3}]
  %12 = xla_tuple %s8, %s9, %s10, %s11
  %s13 = sld [smem:[#allocation0]]
  $region93: #{tpu_custom_call.1} parent=0
    _
  %s15 = ssub.s32 1, %s13
  %s16 = scalar_select 0, %s15, %s13
  $region1: #{tpu_custom_call.1} parent=0
    #allocation2 [shape = 'u8[8192]{0}', space=vmem, size = 0x2000, scoped, tag = 'input window, operand 0']
    #allocation3 [shape = 's32[2]{0}', space=sflag, size = 0x8, scoped, tag = 'scoped memory for tpu_custom_call.1']
    #allocation4 [shape = 's32[2]{0}', space=sflag, size = 0x8, scoped, tag = 'scoped memory for tpu_custom_call.1']
    #allocation5 [shape = 'u8[8192]{0}', space=vmem, size = 0x2000, scoped, tag = 'output window, operand 0']
    #allocation6 [shape = 'u8[16384]{0}', space=vmem, size = 0x4000, scoped, tag = 'output window, operand 1']
    #allocation7 [shape = 's32[2]{0}', space=sflag, size = 0x8, scoped, tag = 'scoped memory for tpu_custom_call.1']
    #allocation8 [shape = 'u8[8192]{0}', space=vmem, size = 0x2000, scoped, tag = 'output window, operand 2']
    %17 = vsyncpa [#allocation3], 0
    %s18 = scalar_lea.sflag [#allocation3], 1
    %19 = vsyncpa %s18, 0
    %20 = vsyncpa [#allocation4], 0
    %s21 = scalar_lea.sflag [#allocation4], 1
    %22 = vsyncpa %s21, 0
    %23 = vsyncpa [#allocation7], 0
    %s24 = scalar_lea.sflag [#allocation7], 1
    %25 = vsyncpa %s24, 0
    loop: start=0, step=1, limit=4
    $region2: #{tpu_custom_call.1} parent=1 // loop_pre_header
      _
    $region3: #{tpu_custom_call.1} parent=1 // loop_header
      %s27 = sphi 0, %s31
      %p28 = scmp.ge.s32.totalorder %s27, 4
      %s37 = sphi 0, %s39
      %s40 = sphi 0, %s37
      %s41 = sphi 0, %s40
      %s57 = sphi 0, %s41
      %s63 = sphi 0, %s65
      %s66 = sphi 0, %s63
      %s67 = sphi 0, %s66
      %s83 = sphi 0, %s67
      %s87 = sphi 0, %s87
      %s89 = sphi 0, %s87
      %s90 = sphi 0, %s89
      %s104 = sphi 0, %s90
      %s108 = sphi 0, %s108
      %s110 = sphi 0, %s108
      %s111 = sphi 0, %s110
      %s125 = sphi 0, %s111
      %s129 = sphi 0, %s129
      %s131 = sphi 0, %s129
      %s132 = sphi 0, %s131
      %s146 = sphi 0, %s132
      %s150 = sphi 0, %s150
      %s152 = sphi 0, %s150
      %s153 = sphi 0, %s152
      %s167 = sphi 0, %s153
      %s171 = sphi 0, %s171
      %s173 = sphi 0, %s171
      %s174 = sphi 0, %s173
      %s188 = sphi 0, %s174
      %s192 = sphi 0, %s192
      %s194 = sphi 0, %s192
      %s195 = sphi 0, %s194
      %s209 = sphi 0, %s195
      %s215 = sphi 0, %s217
      %s218 = sphi 0, %s215
      %s219 = sphi 0, %s218
      %s235 = sphi 0, %s219
      %s241 = sphi 0, %s243
      %s244 = sphi 0, %s241
      %s245 = sphi 0, %s244
      %s261 = sphi 0, %s245
      %s267 = sphi 0, %s269
      %s270 = sphi 0, %s267
      %s271 = sphi 0, %s270
      %s287 = sphi 0, %s271
      %s293 = sphi 0, %s295
      %s296 = sphi 0, %s293
      %s297 = sphi 0, %s296
      %s313 = sphi 0, %s297
    $region4: #{tpu_custom_call.1} parent=1 // loop_header_branch
      %30 = sbr.rel (%p28) target = $region8
    $region5: #{tpu_custom_call.1} parent=1 // loop_body
      %s32 = ssub.s32 %s27, 1
      %s33 = ssub.s32 %s27, 2
      %s34 = sadd.s32 %s27, 1
      %s35 = ssub.s32 %s27, %s34
      %p36 = scmp.eq.s32.totalorder %s35, 0
      %s38 = sadd.s32 %s37, 1
      %s39 = scalar_select %p36, %s37, %s38
      %p42 = pneg %p36
      %p43 = scmp.eq.s32.totalorder %s27, 1
      %p44 = por %p42, %p43
      %p45 = scmp.ne.s32.totalorder %s37, %s40
      %p46 = scmp.eq.s32.totalorder %s27, 0
      %p47 = por %p45, %p46
      %p48 = scmp.ne.s32.totalorder %s37, %s40
      %p49 = scmp.eq.s32.totalorder %s32, 1
      %p50 = por %p48, %p49
      %p51 = scmp.ne.s32.totalorder %s40, %s41
      %p52 = scmp.eq.s32.totalorder %s32, 0
      %p53 = por %p51, %p52
      %p54 = scmp.ne.s32.totalorder %s40, %s41
      %p55 = scmp.eq.s32.totalorder %s33, 1
      %p56 = por %p54, %p55
      %p58 = scmp.ne.s32.totalorder %s41, %s57
      %p59 = scmp.eq.s32.totalorder %s33, 0
      %p60 = por %p58, %p59
      %s61 = ssub.s32 %s27, %s34
      %p62 = scmp.eq.s32.totalorder %s61, 0
      %s64 = sadd.s32 %s63, 1
      %s65 = scalar_select %p62, %s63, %s64
      %p68 = pneg %p62
      %p69 = scmp.eq.s32.totalorder %s27, 1
      %p70 = por %p68, %p69
      %p71 = scmp.ne.s32.totalorder %s63, %s66
      %p72 = scmp.eq.s32.totalorder %s27, 0
      %p73 = por %p71, %p72
      %p74 = scmp.ne.s32.totalorder %s63, %s66
      %p75 = scmp.eq.s32.totalorder %s32, 1
      %p76 = por %p74, %p75
      %p77 = scmp.ne.s32.totalorder %s66, %s67
      %p78 = scmp.eq.s32.totalorder %s32, 0
      %p79 = por %p77, %p78
      %p80 = scmp.ne.s32.totalorder %s66, %s67
      %p81 = scmp.eq.s32.totalorder %s33, 1
      %p82 = por %p80, %p81
      %p84 = scmp.ne.s32.totalorder %s67, %s83
      %p85 = scmp.eq.s32.totalorder %s33, 0
      %p86 = por %p84, %p85
      %s88 = sadd.s32 %s87, 1
      %p91 = scmp.eq.s32.totalorder %s27, 1
      %p92 = scmp.ne.s32.totalorder %s87, %s89
      %p93 = scmp.eq.s32.totalorder %s27, 0
      %p94 = por %p92, %p93
      %p95 = scmp.ne.s32.totalorder %s87, %s89
      %p96 = scmp.eq.s32.totalorder %s32, 1
      %p97 = por %p95, %p96
      %p98 = scmp.ne.s32.totalorder %s89, %s90
      %p99 = scmp.eq.s32.totalorder %s32, 0
      %p100 = por %p98, %p99
      %p101 = scmp.ne.s32.totalorder %s89, %s90
      %p102 = scmp.eq.s32.totalorder %s33, 1
      %p103 = por %p101, %p102
      %p105 = scmp.ne.s32.totalorder %s90, %s104
      %p106 = scmp.eq.s32.totalorder %s33, 0
      %p107 = por %p105, %p106
      %s109 = sadd.s32 %s108, 1
      %p112 = scmp.eq.s32.totalorder %s27, 1
      %p113 = scmp.ne.s32.totalorder %s108, %s110
      %p114 = scmp.eq.s32.totalorder %s27, 0
      %p115 = por %p113, %p114
      %p116 = scmp.ne.s32.totalorder %s108, %s110
      %p117 = scmp.eq.s32.totalorder %s32, 1
      %p118 = por %p116, %p117
      %p119 = scmp.ne.s32.totalorder %s110, %s111
      %p120 = scmp.eq.s32.totalorder %s32, 0
      %p121 = por %p119, %p120
      %p122 = scmp.ne.s32.totalorder %s110, %s111
      %p123 = scmp.eq.s32.totalorder %s33, 1
      %p124 = por %p122, %p123
      %p126 = scmp.ne.s32.totalorder %s111, %s125
      %p127 = scmp.eq.s32.totalorder %s33, 0
      %p128 = por %p126, %p127
      %s130 = sadd.s32 %s129, 1
      %p133 = scmp.eq.s32.totalorder %s27, 1
      %p134 = scmp.ne.s32.totalorder %s129, %s131
      %p135 = scmp.eq.s32.totalorder %s27, 0
      %p136 = por %p134, %p135
      %p137 = scmp.ne.s32.totalorder %s129, %s131
      %p138 = scmp.eq.s32.totalorder %s32, 1
      %p139 = por %p137, %p138
      %p140 = scmp.ne.s32.totalorder %s131, %s132
      %p141 = scmp.eq.s32.totalorder %s32, 0
      %p142 = por %p140, %p141
      %p143 = scmp.ne.s32.totalorder %s131, %s132
      %p144 = scmp.eq.s32.totalorder %s33, 1
      %p145 = por %p143, %p144
      %p147 = scmp.ne.s32.totalorder %s132, %s146
      %p148 = scmp.eq.s32.totalorder %s33, 0
      %p149 = por %p147, %p148
      %s151 = sadd.s32 %s150, 1
      %p154 = scmp.eq.s32.totalorder %s27, 1
      %p155 = scmp.ne.s32.totalorder %s150, %s152
      %p156 = scmp.eq.s32.totalorder %s27, 0
      %p157 = por %p155, %p156
      %p158 = scmp.ne.s32.totalorder %s150, %s152
      %p159 = scmp.eq.s32.totalorder %s32, 1
      %p160 = por %p158, %p159
      %p161 = scmp.ne.s32.totalorder %s152, %s153
      %p162 = scmp.eq.s32.totalorder %s32, 0
      %p163 = por %p161, %p162
      %p164 = scmp.ne.s32.totalorder %s152, %s153
      %p165 = scmp.eq.s32.totalorder %s33, 1
      %p166 = por %p164, %p165
      %p168 = scmp.ne.s32.totalorder %s153, %s167
      %p169 = scmp.eq.s32.totalorder %s33, 0
      %p170 = por %p168, %p169
      %s172 = sadd.s32 %s171, 1
      %p175 = scmp.eq.s32.totalorder %s27, 1
      %p176 = scmp.ne.s32.totalorder %s171, %s173
      %p177 = scmp.eq.s32.totalorder %s27, 0
      %p178 = por %p176, %p177
      %p179 = scmp.ne.s32.totalorder %s171, %s173
      %p180 = scmp.eq.s32.totalorder %s32, 1
      %p181 = por %p179, %p180
      %p182 = scmp.ne.s32.totalorder %s173, %s174
      %p183 = scmp.eq.s32.totalorder %s32, 0
      %p184 = por %p182, %p183
      %p185 = scmp.ne.s32.totalorder %s173, %s174
      %p186 = scmp.eq.s32.totalorder %s33, 1
      %p187 = por %p185, %p186
      %p189 = scmp.ne.s32.totalorder %s174, %s188
      %p190 = scmp.eq.s32.totalorder %s33, 0
      %p191 = por %p189, %p190
      %s193 = sadd.s32 %s192, 1
      %p196 = scmp.eq.s32.totalorder %s27, 1
      %p197 = scmp.ne.s32.totalorder %s192, %s194
      %p198 = scmp.eq.s32.totalorder %s27, 0
      %p199 = por %p197, %p198
      %p200 = scmp.ne.s32.totalorder %s192, %s194
      %p201 = scmp.eq.s32.totalorder %s32, 1
      %p202 = por %p200, %p201
      %p203 = scmp.ne.s32.totalorder %s194, %s195
      %p204 = scmp.eq.s32.totalorder %s32, 0
      %p205 = por %p203, %p204
      %p206 = scmp.ne.s32.totalorder %s194, %s195
      %p207 = scmp.eq.s32.totalorder %s33, 1
      %p208 = por %p206, %p207
      %p210 = scmp.ne.s32.totalorder %s195, %s209
      %p211 = scmp.eq.s32.totalorder %s33, 0
      %p212 = por %p210, %p211
      %s213 = ssub.s32 %s27, %s34
      %p214 = scmp.eq.s32.totalorder %s213, 0
      %s216 = sadd.s32 %s215, 1
      %s217 = scalar_select %p214, %s215, %s216
      %p220 = pneg %p214
      %p221 = scmp.eq.s32.totalorder %s27, 1
      %p222 = por %p220, %p221
      %p223 = scmp.ne.s32.totalorder %s215, %s218
      %p224 = scmp.eq.s32.totalorder %s27, 0
      %p225 = por %p223, %p224
      %p226 = scmp.ne.s32.totalorder %s215, %s218
      %p227 = scmp.eq.s32.totalorder %s32, 1
      %p228 = por %p226, %p227
      %p229 = scmp.ne.s32.totalorder %s218, %s219
      %p230 = scmp.eq.s32.totalorder %s32, 0
      %p231 = por %p229, %p230
      %p232 = scmp.ne.s32.totalorder %s218, %s219
      %p233 = scmp.eq.s32.totalorder %s33, 1
      %p234 = por %p232, %p233
      %p236 = scmp.ne.s32.totalorder %s219, %s235
      %p237 = scmp.eq.s32.totalorder %s33, 0
      %p238 = por %p236, %p237
      %s239 = ssub.s32 %s27, %s34
      %p240 = scmp.eq.s32.totalorder %s239, 0
      %s242 = sadd.s32 %s241, 1
      %s243 = scalar_select %p240, %s241, %s242
      %p246 = pneg %p240
      %p247 = scmp.eq.s32.totalorder %s27, 1
      %p248 = por %p246, %p247
      %p249 = scmp.ne.s32.totalorder %s241, %s244
      %p250 = scmp.eq.s32.totalorder %s27, 0
      %p251 = por %p249, %p250
      %p252 = scmp.ne.s32.totalorder %s241, %s244
      %p253 = scmp.eq.s32.totalorder %s32, 1
      %p254 = por %p252, %p253
      %p255 = scmp.ne.s32.totalorder %s244, %s245
      %p256 = scmp.eq.s32.totalorder %s32, 0
      %p257 = por %p255, %p256
      %p258 = scmp.ne.s32.totalorder %s244, %s245
      %p259 = scmp.eq.s32.totalorder %s33, 1
      %p260 = por %p258, %p259
      %p262 = scmp.ne.s32.totalorder %s245, %s261
      %p263 = scmp.eq.s32.totalorder %s33, 0
      %p264 = por %p262, %p263
      %s265 = ssub.s32 %s27, %s34
      %p266 = scmp.eq.s32.totalorder %s265, 0
      %s268 = sadd.s32 %s267, 1
      %s269 = scalar_select %p266, %s267, %s268
      %p272 = pneg %p266
      %p273 = scmp.eq.s32.totalorder %s27, 1
      %p274 = por %p272, %p273
      %p275 = scmp.ne.s32.totalorder %s267, %s270
      %p276 = scmp.eq.s32.totalorder %s27, 0
      %p277 = por %p275, %p276
      %p278 = scmp.ne.s32.totalorder %s267, %s270
      %p279 = scmp.eq.s32.totalorder %s32, 1
      %p280 = por %p278, %p279
      %p281 = scmp.ne.s32.totalorder %s270, %s271
      %p282 = scmp.eq.s32.totalorder %s32, 0
      %p283 = por %p281, %p282
      %p284 = scmp.ne.s32.totalorder %s270, %s271
      %p285 = scmp.eq.s32.totalorder %s33, 1
      %p286 = por %p284, %p285
      %p288 = scmp.ne.s32.totalorder %s271, %s287
      %p289 = scmp.eq.s32.totalorder %s33, 0
      %p290 = por %p288, %p289
      %s291 = ssub.s32 %s27, %s34
      %p292 = scmp.eq.s32.totalorder %s291, 0
      %s294 = sadd.s32 %s293, 1
      %s295 = scalar_select %p292, %s293, %s294
      %p298 = pneg %p292
      %p299 = scmp.eq.s32.totalorder %s27, 1
      %p300 = por %p298, %p299
      %p301 = scmp.ne.s32.totalorder %s293, %s296
      %p302 = scmp.eq.s32.totalorder %s27, 0
      %p303 = por %p301, %p302
      %p304 = scmp.ne.s32.totalorder %s293, %s296
      %p305 = scmp.eq.s32.totalorder %s32, 1
      %p306 = por %p304, %p305
      %p307 = scmp.ne.s32.totalorder %s296, %s297
      %p308 = scmp.eq.s32.totalorder %s32, 0
      %p309 = por %p307, %p308
      %p310 = scmp.ne.s32.totalorder %s296, %s297
      %p311 = scmp.eq.s32.totalorder %s33, 1
      %p312 = por %p310, %p311
      %p314 = scmp.ne.s32.totalorder %s297, %s313
      %p315 = scmp.eq.s32.totalorder %s33, 0
      %p316 = por %p314, %p315
      %p317 = scmp.le.s32.totalorder 1, %s27
      %p318 = scmp.lt.s32.totalorder %s27, 3
      %p319 = pnand %p317, %p318
      %p320 = pneg %p319
      // Predicated region
      $region9: #{tpu_custom_call.1} parent=5 // pred_check
        _
      $region10: #{tpu_custom_call.1} parent=5 // pred_check_branch
        %322 = sbr.rel (%p319) target = $region12
      $region11: #{tpu_custom_call.1} parent=5 // pred_region
        %s323 = ssub.s32 %s27, 1
        // Predicated region
        $region13: #{tpu_custom_call.1} parent=11 // pred_check
          %p324 = pneg %p100
        $region14: #{tpu_custom_call.1} parent=11 // pred_check_branch
          %326 = sbr.rel (%p324) target = $region16
        $region15: #{tpu_custom_call.1} parent=11 // pred_region
          _
        $region16: #{tpu_custom_call.1} parent=11 // pred_fallthru
          _
        // Predicated region
        $region17: #{tpu_custom_call.1} parent=11 // pred_check
          %p327 = pneg %p121
        $region18: #{tpu_custom_call.1} parent=11 // pred_check_branch
          %329 = sbr.rel (%p327) target = $region20
        $region19: #{tpu_custom_call.1} parent=11 // pred_region
          _
        $region20: #{tpu_custom_call.1} parent=11 // pred_fallthru
          _
        // Predicated region
        $region21: #{tpu_custom_call.1} parent=11 // pred_check
          %p330 = pneg %p142
        $region22: #{tpu_custom_call.1} parent=11 // pred_check_branch
          %332 = sbr.rel (%p330) target = $region24
        $region23: #{tpu_custom_call.1} parent=11 // pred_region
          _
        $region24: #{tpu_custom_call.1} parent=11 // pred_fallthru
          _
        // Predicated region
        $region25: #{tpu_custom_call.1} parent=11 // pred_check
          %p333 = pneg %p163
        $region26: #{tpu_custom_call.1} parent=11 // pred_check_branch
          %335 = sbr.rel (%p333) target = $region28
        $region27: #{tpu_custom_call.1} parent=11 // pred_region
          _
        $region28: #{tpu_custom_call.1} parent=11 // pred_fallthru
          _
        // Predicated region
        $region29: #{tpu_custom_call.1} parent=11 // pred_check
          %p336 = pneg %p184
        $region30: #{tpu_custom_call.1} parent=11 // pred_check_branch
          %338 = sbr.rel (%p336) target = $region32
        $region31: #{tpu_custom_call.1} parent=11 // pred_region
          _
        $region32: #{tpu_custom_call.1} parent=11 // pred_fallthru
          _
        // Predicated region
        $region33: #{tpu_custom_call.1} parent=11 // pred_check
          %p339 = pneg %p205
        $region34: #{tpu_custom_call.1} parent=11 // pred_check_branch
          %341 = sbr.rel (%p339) target = $region36
        $region35: #{tpu_custom_call.1} parent=11 // pred_region
          _
        $region36: #{tpu_custom_call.1} parent=11 // pred_fallthru
          _
      $region12: #{tpu_custom_call.1} parent=5 // pred_fallthru
        _
      %p342 = scmp.lt.s32.totalorder %s27, 2
      // Predicated region
      $region37: #{tpu_custom_call.1} parent=5 // pred_check
        %p343 = pneg %p342
      $region38: #{tpu_custom_call.1} parent=5 // pred_check_branch
        %345 = sbr.rel (%p343) target = $region40
      $region39: #{tpu_custom_call.1} parent=5 // pred_region
        // Predicated region
        $region41: #{tpu_custom_call.1} parent=39 // pred_check
          %p346 = pneg %p47
        $region42: #{tpu_custom_call.1} parent=39 // pred_check_branch
          %348 = sbr.rel (%p346) target = $region44
        $region43: #{tpu_custom_call.1} parent=39 // pred_region
          %s349 = sand.u32 %s37, 1
          %s350 = scalar_lea.sflag [#allocation3], %s349
          %s351 = sand.u32 %s37, 1
          %s352 = smul.addr %s351, 8
          %s353 = scalar_lea.vmem [#allocation2], %s352
          %s355 = ssub.s32 128, 128
          %356 = vsyncadd %s350, %s355
          %s357 = smul.addr %s27, 128
          %s358 = scalar_lea.hbm %s0, %s357
          %s360 = sshll.u32 %s353, 4
          %s361 = int_to_ptr.vmem [resolvable:$true] %s360
          %363 = dma.hbm_to_vmem [thread:$0]  %s358, 128, %s361, %s350
        $region44: #{tpu_custom_call.1} parent=39 // pred_fallthru
          _
        // Predicated region
        $region45: #{tpu_custom_call.1} parent=39 // pred_check
          %p364 = pneg %p73
        $region46: #{tpu_custom_call.1} parent=39 // pred_check_branch
          %366 = sbr.rel (%p364) target = $region48
        $region47: #{tpu_custom_call.1} parent=39 // pred_region
          %p367 = scmp.lt.s32.totalorder %s27, 1
          %s368 = scalar_select %p367, %s27, 1
          %s369 = smul.addr %s368, 2
          %s370 = smul.addr %s369, 8
          %s371 = scalar_lea.vmem %s1, %s370
        $region48: #{tpu_custom_call.1} parent=39 // pred_fallthru
          _
      $region40: #{tpu_custom_call.1} parent=5 // pred_fallthru
        _
      %p372 = scmp.le.s32.totalorder 1, %s27
      %p373 = scmp.lt.s32.totalorder %s27, 3
      %p374 = pnand %p372, %p373
      %p375 = pneg %p374
      // Predicated region
      $region49: #{tpu_custom_call.1} parent=5 // pred_check
        _
      $region50: #{tpu_custom_call.1} parent=5 // pred_check_branch
        %377 = sbr.rel (%p374) target = $region52
      $region51: #{tpu_custom_call.1} parent=5 // pred_region
        %s378 = ssub.s32 %s27, 1
        %s379 = sand.u32 %s40, 1
        %s380 = scalar_lea.sflag [#allocation3], %s379
        %s381 = sand.u32 %s40, 1
        %s382 = smul.addr %s381, 8
        %s383 = scalar_lea.vmem [#allocation2], %s382
        // Predicated region
        $region53: #{tpu_custom_call.1} parent=51 // pred_check
          %p384 = pneg %p53
        $region54: #{tpu_custom_call.1} parent=51 // pred_check_branch
          %386 = sbr.rel (%p384) target = $region56
        $region55: #{tpu_custom_call.1} parent=51 // pred_region
          %387 = dma.done %s380, 128
        $region56: #{tpu_custom_call.1} parent=51 // pred_fallthru
          _
        %s388 = sand.u32 %s40, 1
        %s389 = scalar_lea.sflag [#allocation3], %s388
        %s390 = sand.u32 %s40, 1
        %s391 = smul.addr %s390, 8
        %s392 = scalar_lea.vmem [#allocation2], %s391
        %p393 = pneg %p53
        %p394 = pneg %p50
        %p395 = scmp.lt.s32.totalorder %s32, 1
        %s396 = scalar_select %p395, %s32, 1
        %s397 = smul.addr %s396, 2
        %s398 = smul.addr %s397, 8
        %s399 = scalar_lea.vmem %s1, %s398
        %p400 = pneg %p79
        %p401 = pneg %p76
        %p402 = pneg %p100
        %p403 = pneg %p97
        %p404 = pneg %p121
        %p405 = pneg %p118
        %p406 = pneg %p142
        %p407 = pneg %p139
        %p408 = pneg %p163
        %p409 = pneg %p160
        %p410 = pneg %p184
        %p411 = pneg %p181
        %p412 = pneg %p205
        %p413 = pneg %p202
        %p414 = pneg %p231
        %p415 = pneg %p228
        %s416 = sand.u32 %s218, 1
        %s417 = scalar_lea.sflag [#allocation4], %s416
        %s418 = sand.u32 %s218, 1
        %s419 = smul.addr %s418, 8
        %s420 = scalar_lea.vmem [#allocation5], %s419
        %p421 = pneg %p257
        %p422 = pneg %p254
        %s423 = sand.u32 %s32, 1
        %s424 = scalar_lea.sflag [#allocation7], %s423
        %s425 = sand.u32 %s244, 1
        %s426 = smul.addr %s425, 16
        %s427 = scalar_lea.vmem [#allocation6], %s426
        %p428 = pneg %p283
        %p429 = pneg %p280
        %s430 = sand.u32 %s32, 1
        %s431 = scalar_lea.sflag [#allocation7], %s430
        %s432 = sand.u32 %s270, 1
        %s433 = smul.addr %s432, 8
        %s434 = scalar_lea.vmem [#allocation8], %s433
        %p435 = pneg %p309
        %p436 = pneg %p306
        %p437 = scmp.lt.s32.totalorder %s32, 1
        %s438 = scalar_select %p437, %s32, 1
        %s439 = smul.addr %s438, 2
        %s440 = smul.addr %s439, 8
        %s441 = scalar_lea.vmem %s11, %s440
        %p442 = scmp.lt.s32.totalorder %s32, 1
        %s443 = scalar_select %p442, %s32, 1
        %s444 = smul.addr %s443, 2
        %s445 = smul.addr %s444, 8
        %s446 = scalar_lea.vmem %s1, %s445
        %p447 = scmp.lt.s32.totalorder %s32, 1
        %s448 = scalar_select %p447, %s32, 1
        %s449 = smul.addr %s448, 2
        %s450 = smul.addr %s449, 8
        %s451 = scalar_lea.vmem %s11, %s450
        %v453 = vld [vmem:[%s383] sm:$0xff]
        %v454 = vld [vmem:[%s446] sm:$0xff]
        %v455 = vld [vmem:[%s446 + $0x8] sm:$0xff]
        %v456 = vpack.c.bf16 %v453, %v453
        %v457 = vpack.c.bf16 %v455, %v454
        %v458 = vld [vmem:[%s2] sm:$0xf]
        %v459 = vld [vmem:[%s2 + $0x4] sm:$0xf]
        %v460 = vld [vmem:[%s2 + $0x8] sm:$0xf]
        %v461 = vld [vmem:[%s2 + $0xc] sm:$0xf]
        %v462 = vld [vmem:[%s3] sm:$0x1]
        %v463 = vlaneseq
        %v464 = vshrl.u32 %v463, 7
        %v465 = vsub.s32 0, %v464
        %v466 = vrot.slane %v462, %v465
        %v471 = vunpack.c.l.b16 %v458
        %v472 = vunpack.c.l.b16 %v459
        %v473 = vunpack.c.l.b16 %v460
        %v474 = vunpack.c.l.b16 %v461
        %v475 = vpack.c.b16 %v472, %v471
        %v476 = vpack.c.b16 %v474, %v473
        %vm479 = vcmask 261120
        %v481 = vsel %vm479, %v456, 0
        %483 = vmatprep.subr.bf16.mxu0 0
        %484 = vmatpush1.bf16.msra.mxu0 0
        %485 = vmatprep.subr.bf16.mxu0 0
        %486 = vmatpush1.bf16.msra.mxu0 0
        %487 = vmatprep.subr.bf16.mxu0 0
        %488 = vmatpush1.bf16.msra.mxu0 0
        %489 = vmatprep.subr.bf16.mxu0 0
        %490 = vmatpush1.bf16.msra.mxu0 0
        %491 = vmatprep.subr.bf16.mxu0 0
        %492 = vmatpush1.bf16.msra.mxu0 0
        %493 = vmatprep.subr.bf16.mxu0 0
        %494 = vmatpush1.bf16.msra.mxu0 0
        %495 = vmatprep.subr.bf16.mxu0 0
        %496 = vmatpush1.bf16.msra.mxu0 %v476
        %497 = vmatprep.subr.bf16.mxu0 0
        %498 = vmatpush1.bf16.msra.mxu0 %v475
        %499 = vmatprep.subr.bf16.mxu0 0
        %500 = vmatpush2.bf16.msra.mxu0 0
        %501 = vmatprep.subr.bf16.mxu0 0
        %502 = vmatpush2.bf16.msra.mxu0 0
        %503 = vmatprep.subr.bf16.mxu0 0
        %504 = vmatpush2.bf16.msra.mxu0 0
        %505 = vmatprep.subr.bf16.mxu0 0
        %506 = vmatpush2.bf16.msra.mxu0 0
        %507 = vmatprep.subr.bf16.mxu0 0
        %508 = vmatpush2.bf16.msra.mxu0 0
        %509 = vmatprep.subr.bf16.mxu0 0
        %510 = vmatpush2.bf16.msra.mxu0 0
        %511 = vmatprep.subr.bf16.mxu0 0
        %512 = vmatpush2.bf16.msra.mxu0 0
        %513 = vmatprep.subr.bf16.mxu0 0
        %514 = vmatpush2.bf16.msra.mxu0 0
        %515 = vmatprep.mubr.bf16.mxu0 0
        %516 = vmatmul.mubr.bf16.gmra.mxu0 %v481
        %v517 = vpop.f32.mrf.mxu0
        %v518 = vadd.f32 %v466, %v517
        %v519 = vpop.f32.mrf.mxu0
        %v520 = vpop.f32.mrf.mxu0
        %v521 = vpop.f32.mrf.mxu0
        %522 = vdwg.mxu0
        %s523 = scalar_lea.vmem %s2, 16
        %v524 = vld [vmem:[%s523] sm:$0xf]
        %v525 = vld [vmem:[%s523 + $0x4] sm:$0xf]
        %v526 = vld [vmem:[%s523 + $0x8] sm:$0xf]
        %v527 = vld [vmem:[%s523 + $0xc] sm:$0xf]
        %v528 = vld [vmem:[%s3 + $0x1] sm:$0x1]
        %v529 = vlaneseq
        %v530 = vshrl.u32 %v529, 7
        %v531 = vsub.s32 0, %v530
        %v532 = vrot.slane %v528, %v531
        %v537 = vunpack.c.l.b16 %v524
        %v538 = vunpack.c.l.b16 %v525
        %v539 = vunpack.c.l.b16 %v526
        %v540 = vunpack.c.l.b16 %v527
        %v541 = vpack.c.b16 %v538, %v537
        %v542 = vpack.c.b16 %v540, %v539
        %v546 = vsel %vm479, %v457, 0
        %548 = vmatprep.subr.bf16.mxu0 0
        %549 = vmatpush1.bf16.msra.mxu0 0
        %550 = vmatprep.subr.bf16.mxu0 0
        %551 = vmatpush1.bf16.msra.mxu0 0
        %552 = vmatprep.subr.bf16.mxu0 0
        %553 = vmatpush1.bf16.msra.mxu0 0
        %554 = vmatprep.subr.bf16.mxu0 0
        %555 = vmatpush1.bf16.msra.mxu0 0
        %556 = vmatprep.subr.bf16.mxu0 0
        %557 = vmatpush1.bf16.msra.mxu0 0
        %558 = vmatprep.subr.bf16.mxu0 0
        %559 = vmatpush1.bf16.msra.mxu0 0
        %560 = vmatprep.subr.bf16.mxu0 0
        %561 = vmatpush1.bf16.msra.mxu0 %v542
        %562 = vmatprep.subr.bf16.mxu0 0
        %563 = vmatpush1.bf16.msra.mxu0 %v541
        %564 = vmatprep.subr.bf16.mxu0 0
        %565 = vmatpush2.bf16.msra.mxu0 0
        %566 = vmatprep.subr.bf16.mxu0 0
        %567 = vmatpush2.bf16.msra.mxu0 0
        %568 = vmatprep.subr.bf16.mxu0 0
        %569 = vmatpush2.bf16.msra.mxu0 0
        %570 = vmatprep.subr.bf16.mxu0 0
        %571 = vmatpush2.bf16.msra.mxu0 0
        %572 = vmatprep.subr.bf16.mxu0 0
        %573 = vmatpush2.bf16.msra.mxu0 0
        %574 = vmatprep.subr.bf16.mxu0 0
        %575 = vmatpush2.bf16.msra.mxu0 0
        %576 = vmatprep.subr.bf16.mxu0 0
        %577 = vmatpush2.bf16.msra.mxu0 0
        %578 = vmatprep.subr.bf16.mxu0 0
        %579 = vmatpush2.bf16.msra.mxu0 0
        %580 = vmatprep.mubr.bf16.mxu0 0
        %581 = vmatmul.mubr.bf16.gmra.mxu0 %v546
        %v582 = vpop.f32.mrf.mxu0
        %v583 = vadd.f32 %v532, %v582
        %v584 = vpop.f32.mrf.mxu0
        %v585 = vpop.f32.mrf.mxu0
        %v586 = vadd.f32 %v532, %v585
        %v587 = vpop.f32.mrf.mxu0
        %588 = vdwg.mxu0
        %v589 = vpack.c.bf16 %v586, %v583
        %v591 = vsel %vm479, %v589, 0
        %593 = vmatprep.subr.bf16.mxu0 0
        %594 = vmatpush1.bf16.xpose.msra.mxu0 0
        %595 = vmatprep.subr.bf16.mxu0 0
        %596 = vmatpush1.bf16.xpose.msra.mxu0 0
        %597 = vmatprep.subr.bf16.mxu0 0
        %598 = vmatpush1.bf16.xpose.msra.mxu0 0
        %599 = vmatprep.subr.bf16.mxu0 0
        %600 = vmatpush1.bf16.xpose.msra.mxu0 0
        %601 = vmatprep.subr.bf16.mxu0 0
        %602 = vmatpush1.bf16.xpose.msra.mxu0 0
        %603 = vmatprep.subr.bf16.mxu0 0
        %604 = vmatpush1.bf16.xpose.msra.mxu0 0
        %605 = vmatprep.subr.bf16.mxu0 0
        %606 = vmatpush1.bf16.xpose.msra.mxu0 0
        %607 = vmatprep.subr.bf16.mxu0 0
        %608 = vmatpush1.bf16.xpose.msra.mxu0 %v591
        %609 = vmatprep.subr.bf16.mxu0 0
        %610 = vmatpush2.bf16.xpose.msra.mxu0 0
        %611 = vmatprep.subr.bf16.mxu0 0
        %612 = vmatpush2.bf16.xpose.msra.mxu0 0
        %613 = vmatprep.subr.bf16.mxu0 0
        %614 = vmatpush2.bf16.xpose.msra.mxu0 0
        %615 = vmatprep.subr.bf16.mxu0 0
        %616 = vmatpush2.bf16.xpose.msra.mxu0 0
        %617 = vmatprep.subr.bf16.mxu0 0
        %618 = vmatpush2.bf16.xpose.msra.mxu0 0
        %619 = vmatprep.subr.bf16.mxu0 0
        %620 = vmatpush2.bf16.xpose.msra.mxu0 0
        %621 = vmatprep.subr.bf16.mxu0 0
        %622 = vmatpush2.bf16.xpose.msra.mxu0 0
        %623 = vmatprep.subr.bf16.mxu0 0
        %624 = vmatpush2.bf16.xpose.msra.mxu0 0
        %625 = vmatprep.mubr.bf16.mxu0 0
        %626 = vmatmul.mubr.bf16.gmra.mxu0 %v481
        %v627 = vpop.f32.mrf.mxu0
        %v628 = vadd.f32 0.0, %v627
        %v629 = vpop.f32.mrf.mxu0
        %v630 = vpop.f32.mrf.mxu0
        %v631 = vpop.f32.mrf.mxu0
        %632 = vdwg.mxu0
        %v633 = vmul.f32 %v628, 0.17677669
        %vm634 = vcmask 130048
        %v635 = vsel %vm634, %v633, -inf
        %636 = vmax.xlane.f32.xlu0 %v635
        %v637 = vpop.xlane.xlu0 %636
        %v638 = vsub.f32 %v633, %v637
        %v639 = vmul.f32 %v638, 1.442695
        %v640 = vpow.pop %v639
        %v641 = vsel %vm634, %v640, 0.0
        %642 = vadd.xlane.f32.xlu0 %v641
        %v643 = vpop.xlane.xlu0 %642
        %v644 = vrcp.pop %v643
        %v645 = vmul.f32 %v640, %v644
        %v646 = vpack.c.bf16 %v518, %v518
        %v648 = vsel %vm479, %v646, 0
        %650 = vmatprep.subr.bf16.mxu0 0
        %651 = vmatpush1.bf16.xpose.msra.mxu0 0
        %652 = vmatprep.subr.bf16.mxu0 0
        %653 = vmatpush1.bf16.xpose.msra.mxu0 0
        %654 = vmatprep.subr.bf16.mxu0 0
        %655 = vmatpush1.bf16.xpose.msra.mxu0 0
        %656 = vmatprep.subr.bf16.mxu0 0
        %657 = vmatpush1.bf16.xpose.msra.mxu0 0
        %658 = vmatprep.subr.bf16.mxu0 0
        %659 = vmatpush1.bf16.xpose.msra.mxu0 0
        %660 = vmatprep.subr.bf16.mxu0 0
        %661 = vmatpush1.bf16.xpose.msra.mxu0 0
        %662 = vmatprep.subr.bf16.mxu0 0
        %663 = vmatpush1.bf16.xpose.msra.mxu0 0
        %664 = vmatprep.subr.bf16.mxu0 0
        %665 = vmatpush1.bf16.xpose.msra.mxu0 %v648
        %666 = vmatprep.subr.bf16.mxu0 0
        %667 = vmatpush2.bf16.xpose.msra.mxu0 0
        %668 = vmatprep.subr.bf16.mxu0 0
        %669 = vmatpush2.bf16.xpose.msra.mxu0 0
        %670 = vmatprep.subr.bf16.mxu0 0
        %671 = vmatpush2.bf16.xpose.msra.mxu0 0
        %672 = vmatprep.subr.bf16.mxu0 0
        %673 = vmatpush2.bf16.xpose.msra.mxu0 0
        %674 = vmatprep.subr.bf16.mxu0 0
        %675 = vmatpush2.bf16.xpose.msra.mxu0 0
        %676 = vmatprep.subr.bf16.mxu0 0
        %677 = vmatpush2.bf16.xpose.msra.mxu0 0
        %678 = vmatprep.subr.bf16.mxu0 0
        %679 = vmatpush2.bf16.xpose.msra.mxu0 0
        %680 = vmatprep.subr.bf16.mxu0 0
        %681 = vmatpush2.bf16.xpose.msra.mxu0 0
        %682 = vmatprep.mubr.bf16.mxu0 0
        %683 = vmatmul.mubr.bf16.gmra.mxu0 %v546
        %v684 = vpop.f32.mrf.mxu0
        %v685 = vadd.f32 0.0, %v684
        %v686 = vpop.f32.mrf.mxu0
        %v687 = vpop.f32.mrf.mxu0
        %v688 = vadd.f32 0.0, %v687
        %v689 = vpop.f32.mrf.mxu0
        %690 = vdwg.mxu0
        %v691 = vmul.f32 %v685, 0.17677669
        %v692 = vmul.f32 %v688, 0.17677669
        %vm693 = vcmask 64512
        %v694 = vsel %vm693, %v691, -inf
        %695 = vmax.xlane.f32.xlu0 %v694
        %v696 = vpop.xlane.xlu0 %695
        %v697 = vsel %vm693, %v692, -inf
        %698 = vmax.xlane.f32.xlu0 %v697
        %v699 = vpop.xlane.xlu0 %698
        %v700 = vsub.f32 %v691, %v696
        %v701 = vsub.f32 %v692, %v699
        %v702 = vmul.f32 %v700, 1.442695
        %v703 = vpow.pop %v702
        %v704 = vmul.f32 %v701, 1.442695
        %v705 = vpow.pop %v704
        %v706 = vsel %vm693, %v703, 0.0
        %707 = vadd.xlane.f32.xlu0 %v706
        %v708 = vpop.xlane.xlu0 %707
        %v709 = vsel %vm693, %v705, 0.0
        %710 = vadd.xlane.f32.xlu0 %v709
        %v711 = vpop.xlane.xlu0 %710
        %v712 = vrcp.pop %v708
        %v713 = vrcp.pop %v711
        %v714 = vmul.f32 %v703, %v712
        %v715 = vmul.f32 %v705, %v713
        %716 = vst.msk [vmem:[%s434] sm:$0xff] %vm634, %v645
        %717 = vst.msk [vmem:[%s451] sm:$0xff] %vm693, %v714
        %718 = vst.msk [vmem:[%s451 + $0x8] sm:$0xff] %vm693, %v715
        %v719 = vpack.c.bf16 %v645, %v645
        %v721 = vsel %vm634, %v719, 0
        %723 = vmatprep.subr.bf16.mxu0 0
        %724 = vmatpush1.bf16.msra.mxu0 0
        %725 = vmatprep.subr.bf16.mxu0 0
        %726 = vmatpush1.bf16.msra.mxu0 0
        %727 = vmatprep.subr.bf16.mxu0 0
        %728 = vmatpush1.bf16.msra.mxu0 0
        %729 = vmatprep.subr.bf16.mxu0 0
        %730 = vmatpush1.bf16.msra.mxu0 0
        %731 = vmatprep.subr.bf16.mxu0 0
        %732 = vmatpush1.bf16.msra.mxu0 0
        %733 = vmatprep.subr.bf16.mxu0 0
        %734 = vmatpush1.bf16.msra.mxu0 0
        %735 = vmatprep.subr.bf16.mxu0 0
        %736 = vmatpush1.bf16.msra.mxu0 0
        %737 = vmatprep.subr.bf16.mxu0 0
        %738 = vmatpush1.bf16.msra.mxu0 %v457
        %739 = vmatprep.subr.bf16.mxu0 0
        %740 = vmatpush2.bf16.msra.mxu0 0
        %741 = vmatprep.subr.bf16.mxu0 0
        %742 = vmatpush2.bf16.msra.mxu0 0
        %743 = vmatprep.subr.bf16.mxu0 0
        %744 = vmatpush2.bf16.msra.mxu0 0
        %745 = vmatprep.subr.bf16.mxu0 0
        %746 = vmatpush2.bf16.msra.mxu0 0
        %747 = vmatprep.subr.bf16.mxu0 0
        %748 = vmatpush2.bf16.msra.mxu0 0
        %749 = vmatprep.subr.bf16.mxu0 0
        %750 = vmatpush2.bf16.msra.mxu0 0
        %751 = vmatprep.subr.bf16.mxu0 0
        %752 = vmatpush2.bf16.msra.mxu0 0
        %753 = vmatprep.subr.bf16.mxu0 0
        %754 = vmatpush2.bf16.msra.mxu0 0
        %755 = vmatprep.mubr.bf16.mxu0 0
        %756 = vmatmul.mubr.bf16.gmra.mxu0 %v721
        %v757 = vpop.f32.mrf.mxu0
        %v758 = vadd.f32 0.0, %v757
        %v759 = vpop.f32.mrf.mxu0
        %v760 = vpop.f32.mrf.mxu0
        %v761 = vpop.f32.mrf.mxu0
        %762 = vdwg.mxu0
        %v763 = vpack.c.bf16 %v715, %v714
        %v765 = vsel %vm693, %v763, 0
        %vm767 = vcmask 1043456
        %v768 = vsel %vm767, %v456, 0
        %770 = vmatprep.subr.bf16.mxu0 0
        %771 = vmatpush1.bf16.msra.mxu0 0
        %772 = vmatprep.subr.bf16.mxu0 0
        %773 = vmatpush1.bf16.msra.mxu0 0
        %774 = vmatprep.subr.bf16.mxu0 0
        %775 = vmatpush1.bf16.msra.mxu0 0
        %776 = vmatprep.subr.bf16.mxu0 0
        %777 = vmatpush1.bf16.msra.mxu0 0
        %778 = vmatprep.subr.bf16.mxu0 0
        %779 = vmatpush1.bf16.msra.mxu0 0
        %780 = vmatprep.subr.bf16.mxu0 0
        %781 = vmatpush1.bf16.msra.mxu0 0
        %782 = vmatprep.subr.bf16.mxu0 0
        %783 = vmatpush1.bf16.msra.mxu0 0
        %784 = vmatprep.subr.bf16.mxu0 0
        %785 = vmatpush1.bf16.msra.mxu0 %v768
        %786 = vmatprep.subr.bf16.mxu0 0
        %787 = vmatpush2.bf16.msra.mxu0 0
        %788 = vmatprep.subr.bf16.mxu0 0
        %789 = vmatpush2.bf16.msra.mxu0 0
        %790 = vmatprep.subr.bf16.mxu0 0
        %791 = vmatpush2.bf16.msra.mxu0 0
        %792 = vmatprep.subr.bf16.mxu0 0
        %793 = vmatpush2.bf16.msra.mxu0 0
        %794 = vmatprep.subr.bf16.mxu0 0
        %795 = vmatpush2.bf16.msra.mxu0 0
        %796 = vmatprep.subr.bf16.mxu0 0
        %797 = vmatpush2.bf16.msra.mxu0 0
        %798 = vmatprep.subr.bf16.mxu0 0
        %799 = vmatpush2.bf16.msra.mxu0 0
        %800 = vmatprep.subr.bf16.mxu0 0
        %801 = vmatpush2.bf16.msra.mxu0 0
        %802 = vmatprep.mubr.bf16.mxu0 0
        %803 = vmatmul.mubr.bf16.gmra.mxu0 %v765
        %v804 = vpop.f32.mrf.mxu0
        %v805 = vadd.f32 0.0, %v804
        %v806 = vpop.f32.mrf.mxu0
        %v807 = vpop.f32.mrf.mxu0
        %v808 = vadd.f32 0.0, %v807
        %v809 = vpop.f32.mrf.mxu0
        %810 = vdwg.mxu0
        %v811 = vpack.c.bf16 %v758, %v758
        %v812 = vld [vmem:[%s4] sm:$0xf]
        %v813 = vld [vmem:[%s4 + $0x4] sm:$0xf]
        %v814 = vld [vmem:[%s4 + $0x8] sm:$0xf]
        %v815 = vld [vmem:[%s4 + $0xc] sm:$0xf]
        %v816 = vld [vmem:[%s5] sm:$0x1]
        %v817 = vlaneseq
        %v818 = vshrl.u32 %v817, 7
        %v819 = vsub.s32 0, %v818
        %v820 = vrot.slane %v816, %v819
        %v825 = vunpack.c.l.b16 %v812
        %v826 = vunpack.c.l.b16 %v813
        %v827 = vunpack.c.l.b16 %v814
        %v828 = vunpack.c.l.b16 %v815
        %v829 = vpack.c.b16 %v826, %v825
        %v830 = vpack.c.b16 %v828, %v827
        %v834 = vsel %vm479, %v811, 0
        %836 = vmatprep.subr.bf16.mxu0 0
        %837 = vmatpush1.bf16.msra.mxu0 0
        %838 = vmatprep.subr.bf16.mxu0 0
        %839 = vmatpush1.bf16.msra.mxu0 0
        %840 = vmatprep.subr.bf16.mxu0 0
        %841 = vmatpush1.bf16.msra.mxu0 0
        %842 = vmatprep.subr.bf16.mxu0 0
        %843 = vmatpush1.bf16.msra.mxu0 0
        %844 = vmatprep.subr.bf16.mxu0 0
        %845 = vmatpush1.bf16.msra.mxu0 0
        %846 = vmatprep.subr.bf16.mxu0 0
        %847 = vmatpush1.bf16.msra.mxu0 0
        %848 = vmatprep.subr.bf16.mxu0 0
        %849 = vmatpush1.bf16.msra.mxu0 %v830
        %850 = vmatprep.subr.bf16.mxu0 0
        %851 = vmatpush1.bf16.msra.mxu0 %v829
        %852 = vmatprep.subr.bf16.mxu0 0
        %853 = vmatpush2.bf16.msra.mxu0 0
        %854 = vmatprep.subr.bf16.mxu0 0
        %855 = vmatpush2.bf16.msra.mxu0 0
        %856 = vmatprep.subr.bf16.mxu0 0
        %857 = vmatpush2.bf16.msra.mxu0 0
        %858 = vmatprep.subr.bf16.mxu0 0
        %859 = vmatpush2.bf16.msra.mxu0 0
        %860 = vmatprep.subr.bf16.mxu0 0
        %861 = vmatpush2.bf16.msra.mxu0 0
        %862 = vmatprep.subr.bf16.mxu0 0
        %863 = vmatpush2.bf16.msra.mxu0 0
        %864 = vmatprep.subr.bf16.mxu0 0
        %865 = vmatpush2.bf16.msra.mxu0 0
        %866 = vmatprep.subr.bf16.mxu0 0
        %867 = vmatpush2.bf16.msra.mxu0 0
        %868 = vmatprep.mubr.bf16.mxu0 0
        %869 = vmatmul.mubr.bf16.gmra.mxu0 %v834
        %v870 = vpop.f32.mrf.mxu0
        %v871 = vadd.f32 %v820, %v870
        %v872 = vpop.f32.mrf.mxu0
        %v873 = vpop.f32.mrf.mxu0
        %v874 = vpop.f32.mrf.mxu0
        %875 = vdwg.mxu0
        %v876 = vmax.f32 %v871, 0.0
        %v877 = vpack.c.bf16 %v876, %v876
        %v878 = vld [vmem:[%s6] sm:$0xf]
        %v879 = vld [vmem:[%s6 + $0x4] sm:$0xf]
        %v880 = vld [vmem:[%s6 + $0x8] sm:$0xf]
        %v881 = vld [vmem:[%s6 + $0xc] sm:$0xf]
        %v882 = vld [vmem:[%s6 + $0x10] sm:$0xf]
        %v883 = vld [vmem:[%s6 + $0x14] sm:$0xf]
        %v884 = vld [vmem:[%s6 + $0x18] sm:$0xf]
        %v885 = vld [vmem:[%s6 + $0x1c] sm:$0xf]
        %v886 = vld [vmem:[%s7] sm:$0x1]
        %v887 = vlaneseq
        %v888 = vshrl.u32 %v887, 7
        %v889 = vsub.s32 0, %v888
        %v890 = vrot.slane %v886, %v889
        %v899 = vunpack.c.l.b16 %v878
        %v900 = vunpack.c.l.b16 %v879
        %v901 = vunpack.c.l.b16 %v880
        %v902 = vunpack.c.l.b16 %v881
        %v903 = vunpack.c.l.b16 %v882
        %v904 = vunpack.c.l.b16 %v883
        %v905 = vunpack.c.l.b16 %v884
        %v906 = vunpack.c.l.b16 %v885
        %v907 = vpack.c.b16 %v900, %v899
        %v908 = vpack.c.b16 %v902, %v901
        %v909 = vpack.c.b16 %v904, %v903
        %v910 = vpack.c.b16 %v906, %v905
        %vm915 = vcmask 523264
        %v917 = vsel %vm915, %v877, 0
        %919 = vmatprep.subr.bf16.mxu0 0
        %920 = vmatpush1.bf16.msra.mxu0 0
        %921 = vmatprep.subr.bf16.mxu0 0
        %922 = vmatpush1.bf16.msra.mxu0 0
        %923 = vmatprep.subr.bf16.mxu0 0
        %924 = vmatpush1.bf16.msra.mxu0 0
        %925 = vmatprep.subr.bf16.mxu0 0
        %926 = vmatpush1.bf16.msra.mxu0 0
        %927 = vmatprep.subr.bf16.mxu0 0
        %928 = vmatpush1.bf16.msra.mxu0 %v910
        %929 = vmatprep.subr.bf16.mxu0 0
        %930 = vmatpush1.bf16.msra.mxu0 %v909
        %931 = vmatprep.subr.bf16.mxu0 0
        %932 = vmatpush1.bf16.msra.mxu0 %v908
        %933 = vmatprep.subr.bf16.mxu0 0
        %934 = vmatpush1.bf16.msra.mxu0 %v907
        %935 = vmatprep.subr.bf16.mxu0 0
        %936 = vmatpush2.bf16.msra.mxu0 0
        %937 = vmatprep.subr.bf16.mxu0 0
        %938 = vmatpush2.bf16.msra.mxu0 0
        %939 = vmatprep.subr.bf16.mxu0 0
        %940 = vmatpush2.bf16.msra.mxu0 0
        %941 = vmatprep.subr.bf16.mxu0 0
        %942 = vmatpush2.bf16.msra.mxu0 0
        %943 = vmatprep.subr.bf16.mxu0 0
        %944 = vmatpush2.bf16.msra.mxu0 0
        %945 = vmatprep.subr.bf16.mxu0 0
        %946 = vmatpush2.bf16.msra.mxu0 0
        %947 = vmatprep.subr.bf16.mxu0 0
        %948 = vmatpush2.bf16.msra.mxu0 0
        %949 = vmatprep.subr.bf16.mxu0 0
        %950 = vmatpush2.bf16.msra.mxu0 0
        %951 = vmatprep.mubr.bf16.mxu0 0
        %952 = vmatmul.mubr.bf16.gmra.mxu0 %v917
        %v953 = vpop.f32.mrf.mxu0
        %v954 = vadd.f32 %v890, %v953
        %v955 = vpop.f32.mrf.mxu0
        %v956 = vpop.f32.mrf.mxu0
        %v957 = vpop.f32.mrf.mxu0
        %958 = vdwg.mxu0
        %v959 = vpack.c.bf16 %v808, %v805
        %s960 = scalar_lea.vmem %s4, 16
        %v961 = vld [vmem:[%s960] sm:$0xf]
        %v962 = vld [vmem:[%s960 + $0x4] sm:$0xf]
        %v963 = vld [vmem:[%s960 + $0x8] sm:$0xf]
        %v964 = vld [vmem:[%s960 + $0xc] sm:$0xf]
        %v965 = vld [vmem:[%s5 + $0x1] sm:$0x1]
        %v966 = vlaneseq
        %v967 = vshrl.u32 %v966, 7
        %v968 = vsub.s32 0, %v967
        %v969 = vrot.slane %v965, %v968
        %v974 = vunpack.c.l.b16 %v961
        %v975 = vunpack.c.l.b16 %v962
        %v976 = vunpack.c.l.b16 %v963
        %v977 = vunpack.c.l.b16 %v964
        %v978 = vpack.c.b16 %v975, %v974
        %v979 = vpack.c.b16 %v977, %v976
        %v983 = vsel %vm479, %v959, 0
        %985 = vmatprep.subr.bf16.mxu0 0
        %986 = vmatpush1.bf16.msra.mxu0 0
        %987 = vmatprep.subr.bf16.mxu0 0
        %988 = vmatpush1.bf16.msra.mxu0 0
        %989 = vmatprep.subr.bf16.mxu0 0
        %990 = vmatpush1.bf16.msra.mxu0 0
        %991 = vmatprep.subr.bf16.mxu0 0
        %992 = vmatpush1.bf16.msra.mxu0 0
        %993 = vmatprep.subr.bf16.mxu0 0
        %994 = vmatpush1.bf16.msra.mxu0 0
        %995 = vmatprep.subr.bf16.mxu0 0
        %996 = vmatpush1.bf16.msra.mxu0 0
        %997 = vmatprep.subr.bf16.mxu0 0
        %998 = vmatpush1.bf16.msra.mxu0 %v979
        %999 = vmatprep.subr.bf16.mxu0 0
        %1000 = vmatpush1.bf16.msra.mxu0 %v978
        %1001 = vmatprep.subr.bf16.mxu0 0
        %1002 = vmatpush2.bf16.msra.mxu0 0
        %1003 = vmatprep.subr.bf16.mxu0 0
        %1004 = vmatpush2.bf16.msra.mxu0 0
        %1005 = vmatprep.subr.bf16.mxu0 0
        %1006 = vmatpush2.bf16.msra.mxu0 0
        %1007 = vmatprep.subr.bf16.mxu0 0
        %1008 = vmatpush2.bf16.msra.mxu0 0
        %1009 = vmatprep.subr.bf16.mxu0 0
        %1010 = vmatpush2.bf16.msra.mxu0 0
        %1011 = vmatprep.subr.bf16.mxu0 0
        %1012 = vmatpush2.bf16.msra.mxu0 0
        %1013 = vmatprep.subr.bf16.mxu0 0
        %1014 = vmatpush2.bf16.msra.mxu0 0
        %1015 = vmatprep.subr.bf16.mxu0 0
        %1016 = vmatpush2.bf16.msra.mxu0 0
        %1017 = vmatprep.mubr.bf16.mxu0 0
        %1018 = vmatmul.mubr.bf16.gmra.mxu0 %v983
        %v1019 = vpop.f32.mrf.mxu0
        %v1020 = vadd.f32 %v969, %v1019
        %v1021 = vpop.f32.mrf.mxu0
        %v1022 = vpop.f32.mrf.mxu0
        %v1023 = vadd.f32 %v969, %v1022
        %v1024 = vpop.f32.mrf.mxu0
        %1025 = vdwg.mxu0
        %v1026 = vmax.f32 %v1020, 0.0
        %v1027 = vmax.f32 %v1023, 0.0
        %v1028 = vpack.c.bf16 %v1027, %v1026
        %s1029 = scalar_lea.vmem %s6, 32
        %v1030 = vld [vmem:[%s1029] sm:$0xf]
        %v1031 = vld [vmem:[%s1029 + $0x4] sm:$0xf]
        %v1032 = vld [vmem:[%s1029 + $0x8] sm:$0xf]
        %v1033 = vld [vmem:[%s1029 + $0xc] sm:$0xf]
        %v1034 = vld [vmem:[%s1029 + $0x10] sm:$0xf]
        %v1035 = vld [vmem:[%s1029 + $0x14] sm:$0xf]
        %v1036 = vld [vmem:[%s1029 + $0x18] sm:$0xf]
        %v1037 = vld [vmem:[%s1029 + $0x1c] sm:$0xf]
        %v1038 = vld [vmem:[%s7 + $0x1] sm:$0x1]
        %v1039 = vlaneseq
        %v1040 = vshrl.u32 %v1039, 7
        %v1041 = vsub.s32 0, %v1040
        %v1042 = vrot.slane %v1038, %v1041
        %v1051 = vunpack.c.l.b16 %v1030
        %v1052 = vunpack.c.l.b16 %v1031
        %v1053 = vunpack.c.l.b16 %v1032
        %v1054 = vunpack.c.l.b16 %v1033
        %v1055 = vunpack.c.l.b16 %v1034
        %v1056 = vunpack.c.l.b16 %v1035
        %v1057 = vunpack.c.l.b16 %v1036
        %v1058 = vunpack.c.l.b16 %v1037
        %v1059 = vpack.c.b16 %v1052, %v1051
        %v1060 = vpack.c.b16 %v1054, %v1053
        %v1061 = vpack.c.b16 %v1056, %v1055
        %v1062 = vpack.c.b16 %v1058, %v1057
        %v1068 = vsel %vm915, %v1028, 0
        %1070 = vmatprep.subr.bf16.mxu0 0
        %1071 = vmatpush1.bf16.msra.mxu0 0
        %1072 = vmatprep.subr.bf16.mxu0 0
        %1073 = vmatpush1.bf16.msra.mxu0 0
        %1074 = vmatprep.subr.bf16.mxu0 0
        %1075 = vmatpush1.bf16.msra.mxu0 0
        %1076 = vmatprep.subr.bf16.mxu0 0
        %1077 = vmatpush1.bf16.msra.mxu0 0
        %1078 = vmatprep.subr.bf16.mxu0 0
        %1079 = vmatpush1.bf16.msra.mxu0 %v1062
        %1080 = vmatprep.subr.bf16.mxu0 0
        %1081 = vmatpush1.bf16.msra.mxu0 %v1061
        %1082 = vmatprep.subr.bf16.mxu0 0
        %1083 = vmatpush1.bf16.msra.mxu0 %v1060
        %1084 = vmatprep.subr.bf16.mxu0 0
        %1085 = vmatpush1.bf16.msra.mxu0 %v1059
        %1086 = vmatprep.subr.bf16.mxu0 0
        %1087 = vmatpush2.bf16.msra.mxu0 0
        %1088 = vmatprep.subr.bf16.mxu0 0
        %1089 = vmatpush2.bf16.msra.mxu0 0
        %1090 = vmatprep.subr.bf16.mxu0 0
        %1091 = vmatpush2.bf16.msra.mxu0 0
        %1092 = vmatprep.subr.bf16.mxu0 0
        %1093 = vmatpush2.bf16.msra.mxu0 0
        %1094 = vmatprep.subr.bf16.mxu0 0
        %1095 = vmatpush2.bf16.msra.mxu0 0
        %1096 = vmatprep.subr.bf16.mxu0 0
        %1097 = vmatpush2.bf16.msra.mxu0 0
        %1098 = vmatprep.subr.bf16.mxu0 0
        %1099 = vmatpush2.bf16.msra.mxu0 0
        %1100 = vmatprep.subr.bf16.mxu0 0
        %1101 = vmatpush2.bf16.msra.mxu0 0
        %1102 = vmatprep.mubr.bf16.mxu0 0
        %1103 = vmatmul.mubr.bf16.gmra.mxu0 %v1068
        %v1104 = vpop.f32.mrf.mxu0
        %v1105 = vadd.f32 %v1042, %v1104
        %v1106 = vpop.f32.mrf.mxu0
        %v1107 = vpop.f32.mrf.mxu0
        %v1108 = vadd.f32 %v1042, %v1107
        %v1109 = vpop.f32.mrf.mxu0
        %1110 = vdwg.mxu0
        %v1111 = vxor.u32 %v954, 2147483648
        %v1112 = vmul.f32 %v1111, 1.442695
        %v1113 = vpow.pop %v1112
        %v1114 = vadd.f32 %v1113, 1.0
        %v1115 = vrcp.pop %v1114
        %v1116 = vmul.f32 1.0, %v1115
        %v1117 = vmul.f32 %v453, %v1116
        %v1118 = vadd.f32 %v1117, %v954
        %1119 = vst.msk [vmem:[%s420] sm:$0xff] %vm479, %v1118
        %v1120 = vxor.u32 %v1105, 2147483648
        %v1121 = vxor.u32 %v1108, 2147483648
        %v1122 = vmul.f32 %v1120, 1.442695
        %v1123 = vpow.pop %v1122
        %v1124 = vmul.f32 %v1121, 1.442695
        %v1125 = vpow.pop %v1124
        %v1126 = vadd.f32 %v1123, 1.0
        %v1127 = vadd.f32 %v1125, 1.0
        %v1128 = vrcp.pop %v1126
        %v1129 = vmul.f32 1.0, %v1128
        %v1130 = vrcp.pop %v1127
        %v1131 = vmul.f32 1.0, %v1130
        %v1132 = vmul.f32 %v454, %v1129
        %v1133 = vmul.f32 %v455, %v1131
        %v1134 = vmul.f32 %v1105, 0.0001
        %v1135 = vmul.f32 %v1108, 0.0001
        %v1136 = vadd.f32 %v1132, %v1134
        %v1137 = vadd.f32 %v1133, %v1135
        %1138 = vst.msk [vmem:[%s427] sm:$0xff] %vm479, %v1136
        %1139 = vst.msk [vmem:[%s427 + $0x8] sm:$0xff] %vm479, %v1137
        %s1140 = sand.u32 %s218, 1
        %s1141 = scalar_lea.sflag [#allocation4], %s1140
        %s1142 = sand.u32 %s218, 1
        %s1143 = smul.addr %s1142, 8
        %s1144 = scalar_lea.vmem [#allocation5], %s1143
        %s1145 = sand.u32 %s32, 1
        %s1146 = scalar_lea.sflag [#allocation7], %s1145
        %s1147 = sand.u32 %s244, 1
        %s1148 = smul.addr %s1147, 16
        %s1149 = scalar_lea.vmem [#allocation6], %s1148
        %s1150 = sand.u32 %s32, 1
        %s1151 = scalar_lea.sflag [#allocation7], %s1150
        %s1152 = sand.u32 %s270, 1
        %s1153 = smul.addr %s1152, 8
        %s1154 = scalar_lea.vmem [#allocation8], %s1153
        %p1155 = scmp.lt.s32.totalorder %s32, 1
        %s1156 = scalar_select %p1155, %s32, 1
        %s1157 = smul.addr %s1156, 2
        %s1158 = smul.addr %s1157, 8
        %s1159 = scalar_lea.vmem %s11, %s1158
        // Predicated region
        $region57: #{tpu_custom_call.1} parent=51 // pred_check
          %p1160 = pneg %p228
        $region58: #{tpu_custom_call.1} parent=51 // pred_check_branch
          %1162 = sbr.rel (%p1160) target = $region60
        $region59: #{tpu_custom_call.1} parent=51 // pred_region
          %s1164 = ssub.s32 128, 128
          %1165 = vsyncadd %s1141, %s1164
          %s1166 = smul.addr %s32, 128
          %s1167 = scalar_lea.hbm %s8, %s1166
          %s1169 = sshll.u32 %s1144, 4
          %s1170 = int_to_ptr.vmem [resolvable:$true] %s1169
          %1172 = dma.vmem_to_hbm [thread:$0]  %s1170, 128, %s1167, %s1141
        $region60: #{tpu_custom_call.1} parent=51 // pred_fallthru
          _
        // Predicated region
        $region61: #{tpu_custom_call.1} parent=51 // pred_check
          %p1173 = pneg %p254
        $region62: #{tpu_custom_call.1} parent=51 // pred_check_branch
          %1175 = sbr.rel (%p1173) target = $region64
        $region63: #{tpu_custom_call.1} parent=51 // pred_region
          %s1177 = ssub.s32 256, 256
          %1178 = vsyncadd %s1146, %s1177
          %s1179 = smul.addr %s32, 2
          %s1180 = smul.addr %s1179, 128
          %s1181 = scalar_lea.hbm %s9, %s1180
          %s1182 = sshll.u32 %s1149, 4
          %s1183 = int_to_ptr.vmem [resolvable:$true] %s1182
          %1188 = dma.vmem_to_hbm [thread:$0]  %s1183, 256, %s1181, %s1146, 128, 128, 8
        $region64: #{tpu_custom_call.1} parent=51 // pred_fallthru
          _
        // Predicated region
        $region65: #{tpu_custom_call.1} parent=51 // pred_check
          %p1189 = pneg %p280
        $region66: #{tpu_custom_call.1} parent=51 // pred_check_branch
          %1191 = sbr.rel (%p1189) target = $region68
        $region67: #{tpu_custom_call.1} parent=51 // pred_region
          %s1193 = ssub.s32 128, 128
          %1194 = vsyncadd %s1151, %s1193
          %s1195 = smul.addr %s32, 128
          %s1196 = scalar_lea.hbm %s10, %s1195
          %s1198 = sshll.u32 %s1154, 4
          %s1199 = int_to_ptr.vmem [resolvable:$true] %s1198
          %1201 = dma.vmem_to_hbm [thread:$0]  %s1199, 128, %s1196, %s1151
        $region68: #{tpu_custom_call.1} parent=51 // pred_fallthru
          _
        // Predicated region
        $region69: #{tpu_custom_call.1} parent=51 // pred_check
          %p1202 = pneg %p306
        $region70: #{tpu_custom_call.1} parent=51 // pred_check_branch
          %1204 = sbr.rel (%p1202) target = $region72
        $region71: #{tpu_custom_call.1} parent=51 // pred_region
          _
        $region72: #{tpu_custom_call.1} parent=51 // pred_fallthru
          _
      $region52: #{tpu_custom_call.1} parent=5 // pred_fallthru
        _
      %p1205 = scmp.le.s32.totalorder 2, %s27
      // Predicated region
      $region73: #{tpu_custom_call.1} parent=5 // pred_check
        %p1206 = pneg %p1205
      $region74: #{tpu_custom_call.1} parent=5 // pred_check_branch
        %1208 = sbr.rel (%p1206) target = $region76
      $region75: #{tpu_custom_call.1} parent=5 // pred_region
        %s1209 = ssub.s32 %s27, 2
        // Predicated region
        $region77: #{tpu_custom_call.1} parent=75 // pred_check
          %p1210 = pneg %p234
        $region78: #{tpu_custom_call.1} parent=75 // pred_check_branch
          %1212 = sbr.rel (%p1210) target = $region80
        $region79: #{tpu_custom_call.1} parent=75 // pred_region
          %s1213 = sand.u32 %s219, 1
          %s1214 = scalar_lea.sflag [#allocation4], %s1213
          %s1215 = sand.u32 %s219, 1
          %s1216 = smul.addr %s1215, 8
          %s1217 = scalar_lea.vmem [#allocation5], %s1216
          %1218 = dma.done %s1214, 128
        $region80: #{tpu_custom_call.1} parent=75 // pred_fallthru
          _
        // Predicated region
        $region81: #{tpu_custom_call.1} parent=75 // pred_check
          %p1219 = pneg %p260
        $region82: #{tpu_custom_call.1} parent=75 // pred_check_branch
          %1221 = sbr.rel (%p1219) target = $region84
        $region83: #{tpu_custom_call.1} parent=75 // pred_region
          %s1222 = sand.u32 %s33, 1
          %s1223 = scalar_lea.sflag [#allocation7], %s1222
          %s1224 = sand.u32 %s245, 1
          %s1225 = smul.addr %s1224, 16
          %s1226 = scalar_lea.vmem [#allocation6], %s1225
          %1227 = dma.done %s1223, 256
        $region84: #{tpu_custom_call.1} parent=75 // pred_fallthru
          _
        // Predicated region
        $region85: #{tpu_custom_call.1} parent=75 // pred_check
          %p1228 = pneg %p286
        $region86: #{tpu_custom_call.1} parent=75 // pred_check_branch
          %1230 = sbr.rel (%p1228) target = $region88
        $region87: #{tpu_custom_call.1} parent=75 // pred_region
          %s1231 = sand.u32 %s33, 1
          %s1232 = scalar_lea.sflag [#allocation7], %s1231
          %s1233 = sand.u32 %s271, 1
          %s1234 = smul.addr %s1233, 8
          %s1235 = scalar_lea.vmem [#allocation8], %s1234
          %1236 = dma.done %s1232, 128
        $region88: #{tpu_custom_call.1} parent=75 // pred_fallthru
          _
        // Predicated region
        $region89: #{tpu_custom_call.1} parent=75 // pred_check
          %p1237 = pneg %p312
        $region90: #{tpu_custom_call.1} parent=75 // pred_check_branch
          %1239 = sbr.rel (%p1237) target = $region92
        $region91: #{tpu_custom_call.1} parent=75 // pred_region
          %p1240 = scmp.lt.s32.totalorder %s33, 1
          %s1241 = scalar_select %p1240, %s33, 1
          %s1242 = smul.addr %s1241, 2
          %s1243 = smul.addr %s1242, 8
          %s1244 = scalar_lea.vmem %s11, %s1243
        $region92: #{tpu_custom_call.1} parent=75 // pred_fallthru
          _
      $region76: #{tpu_custom_call.1} parent=5 // pred_fallthru
        _
    $region6: #{tpu_custom_call.1} parent=1 // loop_footer
      %s31 = sadd.s32 1, %s27
    $region7: #{tpu_custom_call.1} parent=1 // loop_footer_branch
      %26 = sbr.rel target = $region3
    $region8: #{tpu_custom_call.1} parent=1 // loop_exit
      _
    %1245 = vsyncpa [#allocation3], 1
    %s1246 = scalar_lea.sflag [#allocation3], 1
    %1247 = vsyncpa %s1246, 1
    %1248 = vsyncpa [#allocation4], 1
    %s1249 = scalar_lea.sflag [#allocation4], 1
    %1250 = vsyncpa %s1249, 1
    %1251 = vsyncpa [#allocation7], 1
    %s1252 = scalar_lea.sflag [#allocation7], 1
    %1253 = vsyncpa %s1252, 1

</llo_original>
